<compile_context>
chip_gen: v7x
topology: tpu7x:2x2x1
jax: 0.10.0
libtpu: 0.0.40
codegen_flags: <defaults>
</compile_context>

<pallas_src>
import jax
import jax.numpy as jnp
from jax import lax
from jax.experimental import pallas as pl
from jax.experimental.pallas import tpu as pltpu  # noqa: F401  (kept for parity / future scratch use)


def encoder_kernel(x_ref,                      # (S*Bp, H)  flattened time-major embeddings (B padded)
                   h0_ref, c0_ref,             # (2, Bp, H)  [0]=fwd, [1]=rev
                   wih_all_ref,                # (H, 9H)   [fwd i|f|g|o , rev i|f|g|o , gran Wx]
                   whh_f_ref, whh_r_ref,       # (H, 4H) each
                   b_all_ref,                  # (1, 9H)   fused biases (incl. gran bias)
                   wh_ref,                     # (H, H)    gran gate Wh
                   out_ref):                   # (Bp, H)
    SB, H = x_ref.shape
    B = h0_ref.shape[1]
    S = SB // B
    H4 = 4 * H
    H8 = 8 * H

    # ---------- phase 1: one big MXU matmul (both LSTM dirs + gran x-proj) ---
    x2 = x_ref[...]                                            # (S*B, H)
    xp = (jnp.dot(x2, wih_all_ref[...],
                  preferred_element_type=jnp.float32)
          + b_all_ref[...])                                    # (S*B, 9H)
    xp_f = xp[:, :H4]                                          # (S*B, 4H) fwd gates (x part)
    xp_b = xp[:, H4:H8]                                        # (S*B, 4H) rev gates (x part)
    xg = xp[:, H8:]                                            # (S*B, H)  gran x-proj + gran bias

    whh_f = whh_f_ref[...]
    whh_r = whh_r_ref[...]

    def cell(gates, c):
        # gates: (B, 4H) lane-dense, PyTorch gate order [i, f, g, o].
        # 2 EUP pushes over the full vreg instead of 4 over 32-lane slices.
        s = jax.nn.sigmoid(gates)
        t = jnp.tanh(gates)
        i_g = s[:, 0:H]
        f_g = s[:, H:2 * H]
        g_g = t[:, 2 * H:3 * H]
        o_g = s[:, 3 * H:4 * H]
        c_new = f_g * c + i_g * g_g
        h_new = o_g * jnp.tanh(c_new)                          # 3rd EUP push
        return h_new, c_new

    # ---------- phase 2: interleaved fwd/rev recurrence, state kept in vregs -
    hf, cf = h0_ref[0], c0_ref[0]
    hb, cb = h0_ref[1], c0_ref[1]
    hf_seq = [None] * S
    hb_seq = [None] * S
    for t in range(S):
        tf = t * B                 # sublane-aligned (B is a multiple of 8)
        tb = (S - 1 - t) * B
        # forward chain, step t
        gates_f = xp_f[tf:tf + B, :] + jnp.dot(
            hf, whh_f, preferred_element_type=jnp.float32)
        hf, cf = cell(gates_f, cf)
        hf_seq[t] = hf
        # reverse chain, step S-1-t (independent of the forward chain)
        gates_b = xp_b[tb:tb + B, :] + jnp.dot(
            hb, whh_r, preferred_element_type=jnp.float32)
        hb, cb = cell(gates_b, cb)
        hb_seq[S - 1 - t] = hb

    # ---------- phase 3: gran gate, vectorized over the whole (S*B, H) slab --
    o_slab = jnp.concatenate([hf_seq[t] + hb_seq[t] for t in range(S)],
                             axis=0)                           # (S*B, H)
    pre = xg + jnp.dot(o_slab, wh_ref[...],
                       preferred_element_type=jnp.float32)     # bias already in xg
    gated = x2 * jax.nn.sigmoid(pre)                           # (S*B, H)

    # mean over time: tree-sum of sublane-aligned static slices
    parts = [gated[t * B:(t + 1) * B, :] for t in range(S)]
    while len(parts) > 1:
        nxt = [parts[i] + parts[i + 1] for i in range(0, len(parts) - 1, 2)]
        if len(parts) % 2:
            nxt.append(parts[-1])
        parts = nxt
    out_ref[...] = parts[0] * (1.0 / S)


def encoder_forward(english, emb_table, params, h0, c0):
    """Pallas-backed Encoder.forward (type='gran', validation=True)."""
    x = emb_table[english]                                     # (B, S, H) gather (glue)
    x = jnp.transpose(x, (1, 0, 2)).astype(jnp.float32)        # (S, B, H) time-major
    S, B, H = x.shape

    # Pad batch to a full sublane group so every per-step tile is unmasked.
    Bp = ((B + 7) // 8) * 8
    pad = Bp - B
    x_p = jnp.pad(x, ((0, 0), (0, pad), (0, 0)))
    h0_p = jnp.pad(h0.astype(jnp.float32), ((0, 0), (0, pad), (0, 0)))
    c0_p = jnp.pad(c0.astype(jnp.float32), ((0, 0), (0, pad), (0, 0)))
    x2 = x_p.reshape(S * Bp, H)                                # flatten for the kernel

    out = pl.pallas_call(
        encoder_kernel,
        out_shape=jax.ShapeDtypeStruct((Bp, H), jnp.float32),
        # single program: no grid, no BlockSpecs — full arrays land in VMEM
    )(x2, h0_p, c0_p,
      params["wih_all"], params["whh_f"], params["whh_r"],
      params["b_all"], params["wh"])

    return out[:B][None]                                       # (1, B, H)


# ----------------------------- pure-JAX reference ---------------------------

def _lstm_dir_ref(xs, h0, c0, Wih, Whh, bih, bhh, reverse=False):
    Hh = h0.shape[-1]

    def step(carry, x_t):
        h, c = carry
        g = x_t @ Wih.T + bih + h @ Whh.T + bhh
        i = jax.nn.sigmoid(g[:, :Hh])
        f = jax.nn.sigmoid(g[:, Hh:2 * Hh])
        gg = jnp.tanh(g[:, 2 * Hh:3 * Hh])
        o = jax.nn.sigmoid(g[:, 3 * Hh:])
        c = f * c + i * gg
        h = o * jnp.tanh(c)
        return (h, c), h

    seq = xs[::-1] if reverse else xs
    _, hs = lax.scan(step, (h0, c0), seq)
    return hs[::-1] if reverse else hs


if __name__ == "__main__":
    B, S, H, V = 2, 8, 32, 50

    root = jax.random.PRNGKey(0)
    k = jax.random.split(root, 20)

    def rnd(key, shape):
        return 0.1 * jax.random.normal(key, shape, jnp.float32)

    emb_table = jax.random.normal(k[0], (V, H), jnp.float32)   # frozen embeddings
    english = jax.random.randint(k[1], (B, S), 0, V)           # LongTensor of indices
    h0 = rnd(k[2], (2, B, H))                                  # init_hidden (randn)
    c0 = rnd(k[3], (2, B, H))

    # LSTM parameters in PyTorch layout: weight_ih (4H,H), gate order [i,f,g,o]
    Wih_f = rnd(k[4], (4 * H, H)); Whh_f = rnd(k[5], (4 * H, H))
    bih_f = rnd(k[6], (4 * H,));   bhh_f = rnd(k[7], (4 * H,))
    Wih_r = rnd(k[8], (4 * H, H)); Whh_r = rnd(k[9], (4 * H, H))
    bih_r = rnd(k[10], (4 * H,));  bhh_r = rnd(k[11], (4 * H,))
    # 'gran' gate parameters
    Wx = rnd(k[12], (H, H)); bx = rnd(k[13], (H,))
    Wh = rnd(k[14], (H, H)); bh = rnd(k[15], (H,))
    bias = rnd(k[16], (H,))

    # Fused packing: x @ Wih.T keeps the [i,f,g,o] column order of the PyTorch
    # rows; the gran-gate x-projection (Wx) and its bias ride along as the
    # last H columns of the phase-1 slab matmul.
    params = dict(
        wih_all=jnp.concatenate([Wih_f.T, Wih_r.T, Wx.T], axis=1),          # (H, 9H)
        whh_f=Whh_f.T, whh_r=Whh_r.T,                                       # (H, 4H)
        b_all=jnp.concatenate([bih_f + bhh_f, bih_r + bhh_r,
                               bx + bh + bias])[None, :],                   # (1, 9H)
        wh=Wh.T)                                                            # (H, H)

    out = jax.block_until_ready(encoder_forward(english, emb_table, params, h0, c0))
    assert out.shape == (1, B, H), out.shape

    # reference check
    xs = jnp.transpose(emb_table[english], (1, 0, 2)).astype(jnp.float32)   # (S,B,H)
    hs_f = _lstm_dir_ref(xs, h0[0], c0[0], Wih_f, Whh_f, bih_f, bhh_f)
    hs_b = _lstm_dir_ref(xs, h0[1], c0[1], Wih_r, Whh_r, bih_r, bhh_r, reverse=True)
    osum = hs_f + hs_b
    pre = xs @ Wx.T + bx + osum @ Wh.T + bh + bias
    ref = jnp.mean(xs * jax.nn.sigmoid(pre), axis=0)[None]                  # (1,B,H)

    assert jnp.allclose(out, ref, atol=2e-5, rtol=2e-5), \
        float(jnp.max(jnp.abs(out - ref)))
    print("KERNEL_OK")
</pallas_src>

<mosaic_0001>
module attributes {stable_mosaic.version = 11 : i64} {
  func.func @encoder_kernel(%arg0: memref<64x32xf32, #tpu.memory_space<vmem>>, %arg1: memref<2x8x32xf32, #tpu.memory_space<vmem>>, %arg2: memref<2x8x32xf32, #tpu.memory_space<vmem>>, %arg3: memref<32x288xf32, #tpu.memory_space<vmem>>, %arg4: memref<32x128xf32, #tpu.memory_space<vmem>>, %arg5: memref<32x128xf32, #tpu.memory_space<vmem>>, %arg6: memref<1x288xf32, #tpu.memory_space<vmem>>, %arg7: memref<32x32xf32, #tpu.memory_space<vmem>>, %arg8: memref<8x32xf32, #tpu.memory_space<vmem>>) attributes {dimension_semantics = [], scalar_prefetch = 0 : i64, scratch_operands = 0 : i64, tpu.core_type = #tpu.core_type<tc>} {
    %c0 = arith.constant 0 : index
    %c0_0 = arith.constant 0 : index
    %0 = vector.load %arg0[%c0, %c0_0] : memref<64x32xf32, #tpu.memory_space<vmem>>, vector<64x32xf32>
    %c0_1 = arith.constant 0 : index
    %c0_2 = arith.constant 0 : index
    %1 = vector.load %arg3[%c0_1, %c0_2] : memref<32x288xf32, #tpu.memory_space<vmem>>, vector<32x288xf32>
    %cst = arith.constant dense<0.000000e+00> : vector<64x288xf32>
    %2 = tpu.matmul %0, %1, %cst {dimension_numbers = #tpu.dot_dimension_numbers<[1], [0], [0], [1], [0, 0, 1, 1], [], []>} : vector<64x32xf32>, vector<32x288xf32>, vector<64x288xf32> -> vector<64x288xf32>
    %c0_3 = arith.constant 0 : index
    %c0_4 = arith.constant 0 : index
    %3 = vector.load %arg6[%c0_3, %c0_4] : memref<1x288xf32, #tpu.memory_space<vmem>>, vector<1x288xf32>
    %4 = vector.broadcast %3 : vector<1x288xf32> to vector<64x288xf32>
    %5 = arith.addf %2, %4 : vector<64x288xf32>
    %6 = vector.extract_strided_slice %5 {offsets = [0, 0], sizes = [64, 128], strides = [1, 1]} : vector<64x288xf32> to vector<64x128xf32>
    %7 = vector.extract_strided_slice %5 {offsets = [0, 128], sizes = [64, 128], strides = [1, 1]} : vector<64x288xf32> to vector<64x128xf32>
    %8 = vector.extract_strided_slice %5 {offsets = [0, 256], sizes = [64, 32], strides = [1, 1]} : vector<64x288xf32> to vector<64x32xf32>
    %c0_5 = arith.constant 0 : index
    %c0_6 = arith.constant 0 : index
    %9 = vector.load %arg4[%c0_5, %c0_6] : memref<32x128xf32, #tpu.memory_space<vmem>>, vector<32x128xf32>
    %c0_7 = arith.constant 0 : index
    %c0_8 = arith.constant 0 : index
    %10 = vector.load %arg5[%c0_7, %c0_8] : memref<32x128xf32, #tpu.memory_space<vmem>>, vector<32x128xf32>
    %c0_9 = arith.constant 0 : index
    %c0_10 = arith.constant 0 : index
    %c0_11 = arith.constant 0 : index
    %11 = vector.load %arg1[%c0_9, %c0_10, %c0_11] : memref<2x8x32xf32, #tpu.memory_space<vmem>>, vector<1x8x32xf32>
    %12 = vector.shape_cast %11 : vector<1x8x32xf32> to vector<8x32xf32>
    %c0_12 = arith.constant 0 : index
    %c0_13 = arith.constant 0 : index
    %c0_14 = arith.constant 0 : index
    %13 = vector.load %arg2[%c0_12, %c0_13, %c0_14] : memref<2x8x32xf32, #tpu.memory_space<vmem>>, vector<1x8x32xf32>
    %14 = vector.shape_cast %13 : vector<1x8x32xf32> to vector<8x32xf32>
    %c1 = arith.constant 1 : index
    %c0_15 = arith.constant 0 : index
    %c0_16 = arith.constant 0 : index
    %15 = vector.load %arg1[%c1, %c0_15, %c0_16] : memref<2x8x32xf32, #tpu.memory_space<vmem>>, vector<1x8x32xf32>
    %16 = vector.shape_cast %15 : vector<1x8x32xf32> to vector<8x32xf32>
    %c1_17 = arith.constant 1 : index
    %c0_18 = arith.constant 0 : index
    %c0_19 = arith.constant 0 : index
    %17 = vector.load %arg2[%c1_17, %c0_18, %c0_19] : memref<2x8x32xf32, #tpu.memory_space<vmem>>, vector<1x8x32xf32>
    %18 = vector.shape_cast %17 : vector<1x8x32xf32> to vector<8x32xf32>
    %19 = vector.extract_strided_slice %6 {offsets = [0, 0], sizes = [8, 128], strides = [1, 1]} : vector<64x128xf32> to vector<8x128xf32>
    %cst_20 = arith.constant dense<0.000000e+00> : vector<8x128xf32>
    %20 = tpu.matmul %12, %9, %cst_20 {dimension_numbers = #tpu.dot_dimension_numbers<[1], [0], [0], [1], [0, 0, 1, 1], [], []>} : vector<8x32xf32>, vector<32x128xf32>, vector<8x128xf32> -> vector<8x128xf32>
    %21 = arith.addf %19, %20 : vector<8x128xf32>
    %22 = arith.negf %21 : vector<8x128xf32>
    %23 = math.exp %22 : vector<8x128xf32>
    %cst_21 = arith.constant 1.000000e+00 : f32
    %24 = vector.broadcast %cst_21 : f32 to vector<8x128xf32>
    %25 = arith.addf %24, %23 : vector<8x128xf32>
    %26 = arith.divf %24, %25 : vector<8x128xf32>
    %27 = math.tanh %21 : vector<8x128xf32>
    %28 = vector.extract_strided_slice %26 {offsets = [0, 0], sizes = [8, 32], strides = [1, 1]} : vector<8x128xf32> to vector<8x32xf32>
    %29 = vector.extract_strided_slice %26 {offsets = [0, 32], sizes = [8, 32], strides = [1, 1]} : vector<8x128xf32> to vector<8x32xf32>
    %30 = vector.extract_strided_slice %27 {offsets = [0, 64], sizes = [8, 32], strides = [1, 1]} : vector<8x128xf32> to vector<8x32xf32>
    %31 = vector.extract_strided_slice %26 {offsets = [0, 96], sizes = [8, 32], strides = [1, 1]} : vector<8x128xf32> to vector<8x32xf32>
    %32 = arith.mulf %29, %14 : vector<8x32xf32>
    %33 = arith.mulf %28, %30 : vector<8x32xf32>
    %34 = arith.addf %32, %33 : vector<8x32xf32>
    %35 = math.tanh %34 : vector<8x32xf32>
    %36 = arith.mulf %31, %35 : vector<8x32xf32>
    %37 = vector.extract_strided_slice %7 {offsets = [56, 0], sizes = [8, 128], strides = [1, 1]} : vector<64x128xf32> to vector<8x128xf32>
    %cst_22 = arith.constant dense<0.000000e+00> : vector<8x128xf32>
    %38 = tpu.matmul %16, %10, %cst_22 {dimension_numbers = #tpu.dot_dimension_numbers<[1], [0], [0], [1], [0, 0, 1, 1], [], []>} : vector<8x32xf32>, vector<32x128xf32>, vector<8x128xf32> -> vector<8x128xf32>
    %39 = arith.addf %37, %38 : vector<8x128xf32>
    %40 = arith.negf %39 : vector<8x128xf32>
    %41 = math.exp %40 : vector<8x128xf32>
    %cst_23 = arith.constant 1.000000e+00 : f32
    %42 = vector.broadcast %cst_23 : f32 to vector<8x128xf32>
    %43 = arith.addf %42, %41 : vector<8x128xf32>
    %44 = arith.divf %42, %43 : vector<8x128xf32>
    %45 = math.tanh %39 : vector<8x128xf32>
    %46 = vector.extract_strided_slice %44 {offsets = [0, 0], sizes = [8, 32], strides = [1, 1]} : vector<8x128xf32> to vector<8x32xf32>
    %47 = vector.extract_strided_slice %44 {offsets = [0, 32], sizes = [8, 32], strides = [1, 1]} : vector<8x128xf32> to vector<8x32xf32>
    %48 = vector.extract_strided_slice %45 {offsets = [0, 64], sizes = [8, 32], strides = [1, 1]} : vector<8x128xf32> to vector<8x32xf32>
    %49 = vector.extract_strided_slice %44 {offsets = [0, 96], sizes = [8, 32], strides = [1, 1]} : vector<8x128xf32> to vector<8x32xf32>
    %50 = arith.mulf %47, %18 : vector<8x32xf32>
    %51 = arith.mulf %46, %48 : vector<8x32xf32>
    %52 = arith.addf %50, %51 : vector<8x32xf32>
    %53 = math.tanh %52 : vector<8x32xf32>
    %54 = arith.mulf %49, %53 : vector<8x32xf32>
    %55 = vector.extract_strided_slice %6 {offsets = [8, 0], sizes = [8, 128], strides = [1, 1]} : vector<64x128xf32> to vector<8x128xf32>
    %cst_24 = arith.constant dense<0.000000e+00> : vector<8x128xf32>
    %56 = tpu.matmul %36, %9, %cst_24 {dimension_numbers = #tpu.dot_dimension_numbers<[1], [0], [0], [1], [0, 0, 1, 1], [], []>} : vector<8x32xf32>, vector<32x128xf32>, vector<8x128xf32> -> vector<8x128xf32>
    %57 = arith.addf %55, %56 : vector<8x128xf32>
    %58 = arith.negf %57 : vector<8x128xf32>
    %59 = math.exp %58 : vector<8x128xf32>
    %cst_25 = arith.constant 1.000000e+00 : f32
    %60 = vector.broadcast %cst_25 : f32 to vector<8x128xf32>
    %61 = arith.addf %60, %59 : vector<8x128xf32>
    %62 = arith.divf %60, %61 : vector<8x128xf32>
    %63 = math.tanh %57 : vector<8x128xf32>
    %64 = vector.extract_strided_slice %62 {offsets = [0, 0], sizes = [8, 32], strides = [1, 1]} : vector<8x128xf32> to vector<8x32xf32>
    %65 = vector.extract_strided_slice %62 {offsets = [0, 32], sizes = [8, 32], strides = [1, 1]} : vector<8x128xf32> to vector<8x32xf32>
    %66 = vector.extract_strided_slice %63 {offsets = [0, 64], sizes = [8, 32], strides = [1, 1]} : vector<8x128xf32> to vector<8x32xf32>
    %67 = vector.extract_strided_slice %62 {offsets = [0, 96], sizes = [8, 32], strides = [1, 1]} : vector<8x128xf32> to vector<8x32xf32>
    %68 = arith.mulf %65, %34 : vector<8x32xf32>
    %69 = arith.mulf %64, %66 : vector<8x32xf32>
    %70 = arith.addf %68, %69 : vector<8x32xf32>
    %71 = math.tanh %70 : vector<8x32xf32>
    %72 = arith.mulf %67, %71 : vector<8x32xf32>
    %73 = vector.extract_strided_slice %7 {offsets = [48, 0], sizes = [8, 128], strides = [1, 1]} : vector<64x128xf32> to vector<8x128xf32>
    %cst_26 = arith.constant dense<0.000000e+00> : vector<8x128xf32>
    %74 = tpu.matmul %54, %10, %cst_26 {dimension_numbers = #tpu.dot_dimension_numbers<[1], [0], [0], [1], [0, 0, 1, 1], [], []>} : vector<8x32xf32>, vector<32x128xf32>, vector<8x128xf32> -> vector<8x128xf32>
    %75 = arith.addf %73, %74 : vector<8x128xf32>
    %76 = arith.negf %75 : vector<8x128xf32>
    %77 = math.exp %76 : vector<8x128xf32>
    %cst_27 = arith.constant 1.000000e+00 : f32
    %78 = vector.broadcast %cst_27 : f32 to vector<8x128xf32>
    %79 = arith.addf %78, %77 : vector<8x128xf32>
    %80 = arith.divf %78, %79 : vector<8x128xf32>
    %81 = math.tanh %75 : vector<8x128xf32>
    %82 = vector.extract_strided_slice %80 {offsets = [0, 0], sizes = [8, 32], strides = [1, 1]} : vector<8x128xf32> to vector<8x32xf32>
    %83 = vector.extract_strided_slice %80 {offsets = [0, 32], sizes = [8, 32], strides = [1, 1]} : vector<8x128xf32> to vector<8x32xf32>
    %84 = vector.extract_strided_slice %81 {offsets = [0, 64], sizes = [8, 32], strides = [1, 1]} : vector<8x128xf32> to vector<8x32xf32>
    %85 = vector.extract_strided_slice %80 {offsets = [0, 96], sizes = [8, 32], strides = [1, 1]} : vector<8x128xf32> to vector<8x32xf32>
    %86 = arith.mulf %83, %52 : vector<8x32xf32>
    %87 = arith.mulf %82, %84 : vector<8x32xf32>
    %88 = arith.addf %86, %87 : vector<8x32xf32>
    %89 = math.tanh %88 : vector<8x32xf32>
    %90 = arith.mulf %85, %89 : vector<8x32xf32>
    %91 = vector.extract_strided_slice %6 {offsets = [16, 0], sizes = [8, 128], strides = [1, 1]} : vector<64x128xf32> to vector<8x128xf32>
    %cst_28 = arith.constant dense<0.000000e+00> : vector<8x128xf32>
    %92 = tpu.matmul %72, %9, %cst_28 {dimension_numbers = #tpu.dot_dimension_numbers<[1], [0], [0], [1], [0, 0, 1, 1], [], []>} : vector<8x32xf32>, vector<32x128xf32>, vector<8x128xf32> -> vector<8x128xf32>
    %93 = arith.addf %91, %92 : vector<8x128xf32>
    %94 = arith.negf %93 : vector<8x128xf32>
    %95 = math.exp %94 : vector<8x128xf32>
    %cst_29 = arith.constant 1.000000e+00 : f32
    %96 = vector.broadcast %cst_29 : f32 to vector<8x128xf32>
    %97 = arith.addf %96, %95 : vector<8x128xf32>
    %98 = arith.divf %96, %97 : vector<8x128xf32>
    %99 = math.tanh %93 : vector<8x128xf32>
    %100 = vector.extract_strided_slice %98 {offsets = [0, 0], sizes = [8, 32], strides = [1, 1]} : vector<8x128xf32> to vector<8x32xf32>
    %101 = vector.extract_strided_slice %98 {offsets = [0, 32], sizes = [8, 32], strides = [1, 1]} : vector<8x128xf32> to vector<8x32xf32>
    %102 = vector.extract_strided_slice %99 {offsets = [0, 64], sizes = [8, 32], strides = [1, 1]} : vector<8x128xf32> to vector<8x32xf32>
    %103 = vector.extract_strided_slice %98 {offsets = [0, 96], sizes = [8, 32], strides = [1, 1]} : vector<8x128xf32> to vector<8x32xf32>
    %104 = arith.mulf %101, %70 : vector<8x32xf32>
    %105 = arith.mulf %100, %102 : vector<8x32xf32>
    %106 = arith.addf %104, %105 : vector<8x32xf32>
    %107 = math.tanh %106 : vector<8x32xf32>
    %108 = arith.mulf %103, %107 : vector<8x32xf32>
    %109 = vector.extract_strided_slice %7 {offsets = [40, 0], sizes = [8, 128], strides = [1, 1]} : vector<64x128xf32> to vector<8x128xf32>
    %cst_30 = arith.constant dense<0.000000e+00> : vector<8x128xf32>
    %110 = tpu.matmul %90, %10, %cst_30 {dimension_numbers = #tpu.dot_dimension_numbers<[1], [0], [0], [1], [0, 0, 1, 1], [], []>} : vector<8x32xf32>, vector<32x128xf32>, vector<8x128xf32> -> vector<8x128xf32>
    %111 = arith.addf %109, %110 : vector<8x128xf32>
    %112 = arith.negf %111 : vector<8x128xf32>
    %113 = math.exp %112 : vector<8x128xf32>
    %cst_31 = arith.constant 1.000000e+00 : f32
    %114 = vector.broadcast %cst_31 : f32 to vector<8x128xf32>
    %115 = arith.addf %114, %113 : vector<8x128xf32>
    %116 = arith.divf %114, %115 : vector<8x128xf32>
    %117 = math.tanh %111 : vector<8x128xf32>
    %118 = vector.extract_strided_slice %116 {offsets = [0, 0], sizes = [8, 32], strides = [1, 1]} : vector<8x128xf32> to vector<8x32xf32>
    %119 = vector.extract_strided_slice %116 {offsets = [0, 32], sizes = [8, 32], strides = [1, 1]} : vector<8x128xf32> to vector<8x32xf32>
    %120 = vector.extract_strided_slice %117 {offsets = [0, 64], sizes = [8, 32], strides = [1, 1]} : vector<8x128xf32> to vector<8x32xf32>
    %121 = vector.extract_strided_slice %116 {offsets = [0, 96], sizes = [8, 32], strides = [1, 1]} : vector<8x128xf32> to vector<8x32xf32>
    %122 = arith.mulf %119, %88 : vector<8x32xf32>
    %123 = arith.mulf %118, %120 : vector<8x32xf32>
    %124 = arith.addf %122, %123 : vector<8x32xf32>
    %125 = math.tanh %124 : vector<8x32xf32>
    %126 = arith.mulf %121, %125 : vector<8x32xf32>
    %127 = vector.extract_strided_slice %6 {offsets = [24, 0], sizes = [8, 128], strides = [1, 1]} : vector<64x128xf32> to vector<8x128xf32>
    %cst_32 = arith.constant dense<0.000000e+00> : vector<8x128xf32>
    %128 = tpu.matmul %108, %9, %cst_32 {dimension_numbers = #tpu.dot_dimension_numbers<[1], [0], [0], [1], [0, 0, 1, 1], [], []>} : vector<8x32xf32>, vector<32x128xf32>, vector<8x128xf32> -> vector<8x128xf32>
    %129 = arith.addf %127, %128 : vector<8x128xf32>
    %130 = arith.negf %129 : vector<8x128xf32>
    %131 = math.exp %130 : vector<8x128xf32>
    %cst_33 = arith.constant 1.000000e+00 : f32
    %132 = vector.broadcast %cst_33 : f32 to vector<8x128xf32>
    %133 = arith.addf %132, %131 : vector<8x128xf32>
    %134 = arith.divf %132, %133 : vector<8x128xf32>
    %135 = math.tanh %129 : vector<8x128xf32>
    %136 = vector.extract_strided_slice %134 {offsets = [0, 0], sizes = [8, 32], strides = [1, 1]} : vector<8x128xf32> to vector<8x32xf32>
    %137 = vector.extract_strided_slice %134 {offsets = [0, 32], sizes = [8, 32], strides = [1, 1]} : vector<8x128xf32> to vector<8x32xf32>
    %138 = vector.extract_strided_slice %135 {offsets = [0, 64], sizes = [8, 32], strides = [1, 1]} : vector<8x128xf32> to vector<8x32xf32>
    %139 = vector.extract_strided_slice %134 {offsets = [0, 96], sizes = [8, 32], strides = [1, 1]} : vector<8x128xf32> to vector<8x32xf32>
    %140 = arith.mulf %137, %106 : vector<8x32xf32>
    %141 = arith.mulf %136, %138 : vector<8x32xf32>
    %142 = arith.addf %140, %141 : vector<8x32xf32>
    %143 = math.tanh %142 : vector<8x32xf32>
    %144 = arith.mulf %139, %143 : vector<8x32xf32>
    %145 = vector.extract_strided_slice %7 {offsets = [32, 0], sizes = [8, 128], strides = [1, 1]} : vector<64x128xf32> to vector<8x128xf32>
    %cst_34 = arith.constant dense<0.000000e+00> : vector<8x128xf32>
    %146 = tpu.matmul %126, %10, %cst_34 {dimension_numbers = #tpu.dot_dimension_numbers<[1], [0], [0], [1], [0, 0, 1, 1], [], []>} : vector<8x32xf32>, vector<32x128xf32>, vector<8x128xf32> -> vector<8x128xf32>
    %147 = arith.addf %145, %146 : vector<8x128xf32>
    %148 = arith.negf %147 : vector<8x128xf32>
    %149 = math.exp %148 : vector<8x128xf32>
    %cst_35 = arith.constant 1.000000e+00 : f32
    %150 = vector.broadcast %cst_35 : f32 to vector<8x128xf32>
    %151 = arith.addf %150, %149 : vector<8x128xf32>
    %152 = arith.divf %150, %151 : vector<8x128xf32>
    %153 = math.tanh %147 : vector<8x128xf32>
    %154 = vector.extract_strided_slice %152 {offsets = [0, 0], sizes = [8, 32], strides = [1, 1]} : vector<8x128xf32> to vector<8x32xf32>
    %155 = vector.extract_strided_slice %152 {offsets = [0, 32], sizes = [8, 32], strides = [1, 1]} : vector<8x128xf32> to vector<8x32xf32>
    %156 = vector.extract_strided_slice %153 {offsets = [0, 64], sizes = [8, 32], strides = [1, 1]} : vector<8x128xf32> to vector<8x32xf32>
    %157 = vector.extract_strided_slice %152 {offsets = [0, 96], sizes = [8, 32], strides = [1, 1]} : vector<8x128xf32> to vector<8x32xf32>
    %158 = arith.mulf %155, %124 : vector<8x32xf32>
    %159 = arith.mulf %154, %156 : vector<8x32xf32>
    %160 = arith.addf %158, %159 : vector<8x32xf32>
    %161 = math.tanh %160 : vector<8x32xf32>
    %162 = arith.mulf %157, %161 : vector<8x32xf32>
    %163 = vector.extract_strided_slice %6 {offsets = [32, 0], sizes = [8, 128], strides = [1, 1]} : vector<64x128xf32> to vector<8x128xf32>
    %cst_36 = arith.constant dense<0.000000e+00> : vector<8x128xf32>
    %164 = tpu.matmul %144, %9, %cst_36 {dimension_numbers = #tpu.dot_dimension_numbers<[1], [0], [0], [1], [0, 0, 1, 1], [], []>} : vector<8x32xf32>, vector<32x128xf32>, vector<8x128xf32> -> vector<8x128xf32>
    %165 = arith.addf %163, %164 : vector<8x128xf32>
    %166 = arith.negf %165 : vector<8x128xf32>
    %167 = math.exp %166 : vector<8x128xf32>
    %cst_37 = arith.constant 1.000000e+00 : f32
    %168 = vector.broadcast %cst_37 : f32 to vector<8x128xf32>
    %169 = arith.addf %168, %167 : vector<8x128xf32>
    %170 = arith.divf %168, %169 : vector<8x128xf32>
    %171 = math.tanh %165 : vector<8x128xf32>
    %172 = vector.extract_strided_slice %170 {offsets = [0, 0], sizes = [8, 32], strides = [1, 1]} : vector<8x128xf32> to vector<8x32xf32>
    %173 = vector.extract_strided_slice %170 {offsets = [0, 32], sizes = [8, 32], strides = [1, 1]} : vector<8x128xf32> to vector<8x32xf32>
    %174 = vector.extract_strided_slice %171 {offsets = [0, 64], sizes = [8, 32], strides = [1, 1]} : vector<8x128xf32> to vector<8x32xf32>
    %175 = vector.extract_strided_slice %170 {offsets = [0, 96], sizes = [8, 32], strides = [1, 1]} : vector<8x128xf32> to vector<8x32xf32>
    %176 = arith.mulf %173, %142 : vector<8x32xf32>
    %177 = arith.mulf %172, %174 : vector<8x32xf32>
    %178 = arith.addf %176, %177 : vector<8x32xf32>
    %179 = math.tanh %178 : vector<8x32xf32>
    %180 = arith.mulf %175, %179 : vector<8x32xf32>
    %181 = vector.extract_strided_slice %7 {offsets = [24, 0], sizes = [8, 128], strides = [1, 1]} : vector<64x128xf32> to vector<8x128xf32>
    %cst_38 = arith.constant dense<0.000000e+00> : vector<8x128xf32>
    %182 = tpu.matmul %162, %10, %cst_38 {dimension_numbers = #tpu.dot_dimension_numbers<[1], [0], [0], [1], [0, 0, 1, 1], [], []>} : vector<8x32xf32>, vector<32x128xf32>, vector<8x128xf32> -> vector<8x128xf32>
    %183 = arith.addf %181, %182 : vector<8x128xf32>
    %184 = arith.negf %183 : vector<8x128xf32>
    %185 = math.exp %184 : vector<8x128xf32>
    %cst_39 = arith.constant 1.000000e+00 : f32
    %186 = vector.broadcast %cst_39 : f32 to vector<8x128xf32>
    %187 = arith.addf %186, %185 : vector<8x128xf32>
    %188 = arith.divf %186, %187 : vector<8x128xf32>
    %189 = math.tanh %183 : vector<8x128xf32>
    %190 = vector.extract_strided_slice %188 {offsets = [0, 0], sizes = [8, 32], strides = [1, 1]} : vector<8x128xf32> to vector<8x32xf32>
    %191 = vector.extract_strided_slice %188 {offsets = [0, 32], sizes = [8, 32], strides = [1, 1]} : vector<8x128xf32> to vector<8x32xf32>
    %192 = vector.extract_strided_slice %189 {offsets = [0, 64], sizes = [8, 32], strides = [1, 1]} : vector<8x128xf32> to vector<8x32xf32>
    %193 = vector.extract_strided_slice %188 {offsets = [0, 96], sizes = [8, 32], strides = [1, 1]} : vector<8x128xf32> to vector<8x32xf32>
    %194 = arith.mulf %191, %160 : vector<8x32xf32>
    %195 = arith.mulf %190, %192 : vector<8x32xf32>
    %196 = arith.addf %194, %195 : vector<8x32xf32>
    %197 = math.tanh %196 : vector<8x32xf32>
    %198 = arith.mulf %193, %197 : vector<8x32xf32>
    %199 = vector.extract_strided_slice %6 {offsets = [40, 0], sizes = [8, 128], strides = [1, 1]} : vector<64x128xf32> to vector<8x128xf32>
    %cst_40 = arith.constant dense<0.000000e+00> : vector<8x128xf32>
    %200 = tpu.matmul %180, %9, %cst_40 {dimension_numbers = #tpu.dot_dimension_numbers<[1], [0], [0], [1], [0, 0, 1, 1], [], []>} : vector<8x32xf32>, vector<32x128xf32>, vector<8x128xf32> -> vector<8x128xf32>
    %201 = arith.addf %199, %200 : vector<8x128xf32>
    %202 = arith.negf %201 : vector<8x128xf32>
    %203 = math.exp %202 : vector<8x128xf32>
    %cst_41 = arith.constant 1.000000e+00 : f32
    %204 = vector.broadcast %cst_41 : f32 to vector<8x128xf32>
    %205 = arith.addf %204, %203 : vector<8x128xf32>
    %206 = arith.divf %204, %205 : vector<8x128xf32>
    %207 = math.tanh %201 : vector<8x128xf32>
    %208 = vector.extract_strided_slice %206 {offsets = [0, 0], sizes = [8, 32], strides = [1, 1]} : vector<8x128xf32> to vector<8x32xf32>
    %209 = vector.extract_strided_slice %206 {offsets = [0, 32], sizes = [8, 32], strides = [1, 1]} : vector<8x128xf32> to vector<8x32xf32>
    %210 = vector.extract_strided_slice %207 {offsets = [0, 64], sizes = [8, 32], strides = [1, 1]} : vector<8x128xf32> to vector<8x32xf32>
    %211 = vector.extract_strided_slice %206 {offsets = [0, 96], sizes = [8, 32], strides = [1, 1]} : vector<8x128xf32> to vector<8x32xf32>
    %212 = arith.mulf %209, %178 : vector<8x32xf32>
    %213 = arith.mulf %208, %210 : vector<8x32xf32>
    %214 = arith.addf %212, %213 : vector<8x32xf32>
    %215 = math.tanh %214 : vector<8x32xf32>
    %216 = arith.mulf %211, %215 : vector<8x32xf32>
    %217 = vector.extract_strided_slice %7 {offsets = [16, 0], sizes = [8, 128], strides = [1, 1]} : vector<64x128xf32> to vector<8x128xf32>
    %cst_42 = arith.constant dense<0.000000e+00> : vector<8x128xf32>
    %218 = tpu.matmul %198, %10, %cst_42 {dimension_numbers = #tpu.dot_dimension_numbers<[1], [0], [0], [1], [0, 0, 1, 1], [], []>} : vector<8x32xf32>, vector<32x128xf32>, vector<8x128xf32> -> vector<8x128xf32>
    %219 = arith.addf %217, %218 : vector<8x128xf32>
    %220 = arith.negf %219 : vector<8x128xf32>
    %221 = math.exp %220 : vector<8x128xf32>
    %cst_43 = arith.constant 1.000000e+00 : f32
    %222 = vector.broadcast %cst_43 : f32 to vector<8x128xf32>
    %223 = arith.addf %222, %221 : vector<8x128xf32>
    %224 = arith.divf %222, %223 : vector<8x128xf32>
    %225 = math.tanh %219 : vector<8x128xf32>
    %226 = vector.extract_strided_slice %224 {offsets = [0, 0], sizes = [8, 32], strides = [1, 1]} : vector<8x128xf32> to vector<8x32xf32>
    %227 = vector.extract_strided_slice %224 {offsets = [0, 32], sizes = [8, 32], strides = [1, 1]} : vector<8x128xf32> to vector<8x32xf32>
    %228 = vector.extract_strided_slice %225 {offsets = [0, 64], sizes = [8, 32], strides = [1, 1]} : vector<8x128xf32> to vector<8x32xf32>
    %229 = vector.extract_strided_slice %224 {offsets = [0, 96], sizes = [8, 32], strides = [1, 1]} : vector<8x128xf32> to vector<8x32xf32>
    %230 = arith.mulf %227, %196 : vector<8x32xf32>
    %231 = arith.mulf %226, %228 : vector<8x32xf32>
    %232 = arith.addf %230, %231 : vector<8x32xf32>
    %233 = math.tanh %232 : vector<8x32xf32>
    %234 = arith.mulf %229, %233 : vector<8x32xf32>
    %235 = vector.extract_strided_slice %6 {offsets = [48, 0], sizes = [8, 128], strides = [1, 1]} : vector<64x128xf32> to vector<8x128xf32>
    %cst_44 = arith.constant dense<0.000000e+00> : vector<8x128xf32>
    %236 = tpu.matmul %216, %9, %cst_44 {dimension_numbers = #tpu.dot_dimension_numbers<[1], [0], [0], [1], [0, 0, 1, 1], [], []>} : vector<8x32xf32>, vector<32x128xf32>, vector<8x128xf32> -> vector<8x128xf32>
    %237 = arith.addf %235, %236 : vector<8x128xf32>
    %238 = arith.negf %237 : vector<8x128xf32>
    %239 = math.exp %238 : vector<8x128xf32>
    %cst_45 = arith.constant 1.000000e+00 : f32
    %240 = vector.broadcast %cst_45 : f32 to vector<8x128xf32>
    %241 = arith.addf %240, %239 : vector<8x128xf32>
    %242 = arith.divf %240, %241 : vector<8x128xf32>
    %243 = math.tanh %237 : vector<8x128xf32>
    %244 = vector.extract_strided_slice %242 {offsets = [0, 0], sizes = [8, 32], strides = [1, 1]} : vector<8x128xf32> to vector<8x32xf32>
    %245 = vector.extract_strided_slice %242 {offsets = [0, 32], sizes = [8, 32], strides = [1, 1]} : vector<8x128xf32> to vector<8x32xf32>
    %246 = vector.extract_strided_slice %243 {offsets = [0, 64], sizes = [8, 32], strides = [1, 1]} : vector<8x128xf32> to vector<8x32xf32>
    %247 = vector.extract_strided_slice %242 {offsets = [0, 96], sizes = [8, 32], strides = [1, 1]} : vector<8x128xf32> to vector<8x32xf32>
    %248 = arith.mulf %245, %214 : vector<8x32xf32>
    %249 = arith.mulf %244, %246 : vector<8x32xf32>
    %250 = arith.addf %248, %249 : vector<8x32xf32>
    %251 = math.tanh %250 : vector<8x32xf32>
    %252 = arith.mulf %247, %251 : vector<8x32xf32>
    %253 = vector.extract_strided_slice %7 {offsets = [8, 0], sizes = [8, 128], strides = [1, 1]} : vector<64x128xf32> to vector<8x128xf32>
    %cst_46 = arith.constant dense<0.000000e+00> : vector<8x128xf32>
    %254 = tpu.matmul %234, %10, %cst_46 {dimension_numbers = #tpu.dot_dimension_numbers<[1], [0], [0], [1], [0, 0, 1, 1], [], []>} : vector<8x32xf32>, vector<32x128xf32>, vector<8x128xf32> -> vector<8x128xf32>
    %255 = arith.addf %253, %254 : vector<8x128xf32>
    %256 = arith.negf %255 : vector<8x128xf32>
    %257 = math.exp %256 : vector<8x128xf32>
    %cst_47 = arith.constant 1.000000e+00 : f32
    %258 = vector.broadcast %cst_47 : f32 to vector<8x128xf32>
    %259 = arith.addf %258, %257 : vector<8x128xf32>
    %260 = arith.divf %258, %259 : vector<8x128xf32>
    %261 = math.tanh %255 : vector<8x128xf32>
    %262 = vector.extract_strided_slice %260 {offsets = [0, 0], sizes = [8, 32], strides = [1, 1]} : vector<8x128xf32> to vector<8x32xf32>
    %263 = vector.extract_strided_slice %260 {offsets = [0, 32], sizes = [8, 32], strides = [1, 1]} : vector<8x128xf32> to vector<8x32xf32>
    %264 = vector.extract_strided_slice %261 {offsets = [0, 64], sizes = [8, 32], strides = [1, 1]} : vector<8x128xf32> to vector<8x32xf32>
    %265 = vector.extract_strided_slice %260 {offsets = [0, 96], sizes = [8, 32], strides = [1, 1]} : vector<8x128xf32> to vector<8x32xf32>
    %266 = arith.mulf %263, %232 : vector<8x32xf32>
    %267 = arith.mulf %262, %264 : vector<8x32xf32>
    %268 = arith.addf %266, %267 : vector<8x32xf32>
    %269 = math.tanh %268 : vector<8x32xf32>
    %270 = arith.mulf %265, %269 : vector<8x32xf32>
    %271 = vector.extract_strided_slice %6 {offsets = [56, 0], sizes = [8, 128], strides = [1, 1]} : vector<64x128xf32> to vector<8x128xf32>
    %cst_48 = arith.constant dense<0.000000e+00> : vector<8x128xf32>
    %272 = tpu.matmul %252, %9, %cst_48 {dimension_numbers = #tpu.dot_dimension_numbers<[1], [0], [0], [1], [0, 0, 1, 1], [], []>} : vector<8x32xf32>, vector<32x128xf32>, vector<8x128xf32> -> vector<8x128xf32>
    %273 = arith.addf %271, %272 : vector<8x128xf32>
    %274 = arith.negf %273 : vector<8x128xf32>
    %275 = math.exp %274 : vector<8x128xf32>
    %cst_49 = arith.constant 1.000000e+00 : f32
    %276 = vector.broadcast %cst_49 : f32 to vector<8x128xf32>
    %277 = arith.addf %276, %275 : vector<8x128xf32>
    %278 = arith.divf %276, %277 : vector<8x128xf32>
    %279 = math.tanh %273 : vector<8x128xf32>
    %280 = vector.extract_strided_slice %278 {offsets = [0, 0], sizes = [8, 32], strides = [1, 1]} : vector<8x128xf32> to vector<8x32xf32>
    %281 = vector.extract_strided_slice %278 {offsets = [0, 32], sizes = [8, 32], strides = [1, 1]} : vector<8x128xf32> to vector<8x32xf32>
    %282 = vector.extract_strided_slice %279 {offsets = [0, 64], sizes = [8, 32], strides = [1, 1]} : vector<8x128xf32> to vector<8x32xf32>
    %283 = vector.extract_strided_slice %278 {offsets = [0, 96], sizes = [8, 32], strides = [1, 1]} : vector<8x128xf32> to vector<8x32xf32>
    %284 = arith.mulf %281, %250 : vector<8x32xf32>
    %285 = arith.mulf %280, %282 : vector<8x32xf32>
    %286 = arith.addf %284, %285 : vector<8x32xf32>
    %287 = math.tanh %286 : vector<8x32xf32>
    %288 = arith.mulf %283, %287 : vector<8x32xf32>
    %289 = vector.extract_strided_slice %7 {offsets = [0, 0], sizes = [8, 128], strides = [1, 1]} : vector<64x128xf32> to vector<8x128xf32>
    %cst_50 = arith.constant dense<0.000000e+00> : vector<8x128xf32>
    %290 = tpu.matmul %270, %10, %cst_50 {dimension_numbers = #tpu.dot_dimension_numbers<[1], [0], [0], [1], [0, 0, 1, 1], [], []>} : vector<8x32xf32>, vector<32x128xf32>, vector<8x128xf32> -> vector<8x128xf32>
    %291 = arith.addf %289, %290 : vector<8x128xf32>
    %292 = arith.negf %291 : vector<8x128xf32>
    %293 = math.exp %292 : vector<8x128xf32>
    %cst_51 = arith.constant 1.000000e+00 : f32
    %294 = vector.broadcast %cst_51 : f32 to vector<8x128xf32>
    %295 = arith.addf %294, %293 : vector<8x128xf32>
    %296 = arith.divf %294, %295 : vector<8x128xf32>
    %297 = math.tanh %291 : vector<8x128xf32>
    %298 = vector.extract_strided_slice %296 {offsets = [0, 0], sizes = [8, 32], strides = [1, 1]} : vector<8x128xf32> to vector<8x32xf32>
    %299 = vector.extract_strided_slice %296 {offsets = [0, 32], sizes = [8, 32], strides = [1, 1]} : vector<8x128xf32> to vector<8x32xf32>
    %300 = vector.extract_strided_slice %297 {offsets = [0, 64], sizes = [8, 32], strides = [1, 1]} : vector<8x128xf32> to vector<8x32xf32>
    %301 = vector.extract_strided_slice %296 {offsets = [0, 96], sizes = [8, 32], strides = [1, 1]} : vector<8x128xf32> to vector<8x32xf32>
    %302 = arith.mulf %299, %268 : vector<8x32xf32>
    %303 = arith.mulf %298, %300 : vector<8x32xf32>
    %304 = arith.addf %302, %303 : vector<8x32xf32>
    %305 = math.tanh %304 : vector<8x32xf32>
    %306 = arith.mulf %301, %305 : vector<8x32xf32>
    %307 = arith.addf %36, %306 : vector<8x32xf32>
    %308 = arith.addf %72, %270 : vector<8x32xf32>
    %309 = arith.addf %108, %234 : vector<8x32xf32>
    %310 = arith.addf %144, %198 : vector<8x32xf32>
    %311 = arith.addf %180, %162 : vector<8x32xf32>
    %312 = arith.addf %216, %126 : vector<8x32xf32>
    %313 = arith.addf %252, %90 : vector<8x32xf32>
    %314 = arith.addf %288, %54 : vector<8x32xf32>
    %315 = tpu.concatenate %307, %308, %309, %310, %311, %312, %313, %314 in 0 : vector<8x32xf32>, vector<8x32xf32>, vector<8x32xf32>, vector<8x32xf32>, vector<8x32xf32>, vector<8x32xf32>, vector<8x32xf32>, vector<8x32xf32> -> vector<64x32xf32>
    %c0_52 = arith.constant 0 : index
    %c0_53 = arith.constant 0 : index
    %316 = vector.load %arg7[%c0_52, %c0_53] : memref<32x32xf32, #tpu.memory_space<vmem>>, vector<32x32xf32>
    %cst_54 = arith.constant dense<0.000000e+00> : vector<64x32xf32>
    %317 = tpu.matmul %315, %316, %cst_54 {dimension_numbers = #tpu.dot_dimension_numbers<[1], [0], [0], [1], [0, 0, 1, 1], [], []>} : vector<64x32xf32>, vector<32x32xf32>, vector<64x32xf32> -> vector<64x32xf32>
    %318 = arith.addf %8, %317 : vector<64x32xf32>
    %319 = arith.negf %318 : vector<64x32xf32>
    %320 = math.exp %319 : vector<64x32xf32>
    %cst_55 = arith.constant 1.000000e+00 : f32
    %321 = vector.broadcast %cst_55 : f32 to vector<64x32xf32>
    %322 = arith.addf %321, %320 : vector<64x32xf32>
    %323 = arith.divf %321, %322 : vector<64x32xf32>
    %324 = arith.mulf %0, %323 : vector<64x32xf32>
    %325 = vector.extract_strided_slice %324 {offsets = [0, 0], sizes = [8, 32], strides = [1, 1]} : vector<64x32xf32> to vector<8x32xf32>
    %326 = vector.extract_strided_slice %324 {offsets = [8, 0], sizes = [8, 32], strides = [1, 1]} : vector<64x32xf32> to vector<8x32xf32>
    %327 = vector.extract_strided_slice %324 {offsets = [16, 0], sizes = [8, 32], strides = [1, 1]} : vector<64x32xf32> to vector<8x32xf32>
    %328 = vector.extract_strided_slice %324 {offsets = [24, 0], sizes = [8, 32], strides = [1, 1]} : vector<64x32xf32> to vector<8x32xf32>
    %329 = vector.extract_strided_slice %324 {offsets = [32, 0], sizes = [8, 32], strides = [1, 1]} : vector<64x32xf32> to vector<8x32xf32>
    %330 = vector.extract_strided_slice %324 {offsets = [40, 0], sizes = [8, 32], strides = [1, 1]} : vector<64x32xf32> to vector<8x32xf32>
    %331 = vector.extract_strided_slice %324 {offsets = [48, 0], sizes = [8, 32], strides = [1, 1]} : vector<64x32xf32> to vector<8x32xf32>
    %332 = vector.extract_strided_slice %324 {offsets = [56, 0], sizes = [8, 32], strides = [1, 1]} : vector<64x32xf32> to vector<8x32xf32>
    %333 = arith.addf %325, %326 : vector<8x32xf32>
    %334 = arith.addf %327, %328 : vector<8x32xf32>
    %335 = arith.addf %329, %330 : vector<8x32xf32>
    %336 = arith.addf %331, %332 : vector<8x32xf32>
    %337 = arith.addf %333, %334 : vector<8x32xf32>
    %338 = arith.addf %335, %336 : vector<8x32xf32>
    %339 = arith.addf %337, %338 : vector<8x32xf32>
    %cst_56 = arith.constant 1.250000e-01 : f32
    %340 = vector.broadcast %cst_56 : f32 to vector<8x32xf32>
    %341 = arith.mulf %339, %340 : vector<8x32xf32>
    %c0_57 = arith.constant 0 : index
    %c0_58 = arith.constant 0 : index
    %342 = vector.load %arg8[%c0_57, %c0_58] : memref<8x32xf32, #tpu.memory_space<vmem>>, vector<8x32xf32>
    tpu.vector_store %arg8[%c0_57, %c0_58], %341 {strides = array<i32>} : memref<8x32xf32, #tpu.memory_space<vmem>>, vector<8x32xf32>,
    return
  }
}

</mosaic_0001>

<llo_original>
// kernel: tpu_custom_call.1
$region0: #{tpu_custom_call.1}
  #allocation0 [shape = 'u32[]', space=smem, size = 0x4, offset = 0x4, fixed_abs, tag = 'smem constant byte address 0x4 - core index']
  #allocation1 [shape = 'u32[144,128]{1,0:T(1,128)}', space=vmem, size = 0x12000, scoped, tag = 'internal scratch']
  %s0 = inlined_call_operand.vmem [shape: f32[64,32], index: 0, kind: input, shape index: {}]
  %s1 = inlined_call_operand.hbm [shape: f32[2,8,32], index: 1, kind: input, shape index: {}]
  %s2 = inlined_call_operand.hbm [shape: f32[2,8,32], index: 2, kind: input, shape index: {}]
  %s3 = inlined_call_operand.vmem [shape: f32[32,288], index: 3, kind: input, shape index: {}]
  %s4 = inlined_call_operand.hbm [shape: f32[32,128], index: 4, kind: input, shape index: {}]
  %s5 = inlined_call_operand.hbm [shape: f32[32,128], index: 5, kind: input, shape index: {}]
  %s6 = inlined_call_operand.vmem [shape: f32[1,288], index: 6, kind: input, shape index: {}]
  %s7 = inlined_call_operand.hbm [shape: f32[32,32], index: 7, kind: input, shape index: {}]
  %s8 = inlined_call_operand.hbm [shape: f32[8,32], index: 8, kind: output, shape index: {}]
  %s9 = sld [smem:[#allocation0]]
  $region62: #{tpu_custom_call.1} parent=0
    _
  %s11 = ssub.s32 1, %s9
  %s12 = scalar_select 0, %s11, %s9
  $region1: #{tpu_custom_call.1} parent=0
    #allocation2 [shape = 'u8[8192]{0}', space=vmem, size = 0x2000, scoped, tag = 'input window, operand 1, single buffered']
    #allocation3 [shape = 's32[1]{0}', space=sflag, size = 0x4, scoped, tag = 'scoped memory for tpu_custom_call.1']
    #allocation4 [shape = 's32[1]{0}', space=sflag, size = 0x4, scoped, tag = 'scoped memory for tpu_custom_call.1']
    #allocation5 [shape = 'u8[8192]{0}', space=vmem, size = 0x2000, scoped, tag = 'input window, operand 2, single buffered']
    #allocation6 [shape = 's32[1]{0}', space=sflag, size = 0x4, scoped, tag = 'scoped memory for tpu_custom_call.1']
    #allocation7 [shape = 'u8[16384]{0}', space=vmem, size = 0x4000, scoped, tag = 'input window, operand 4, single buffered']
    #allocation8 [shape = 'u8[16384]{0}', space=vmem, size = 0x4000, scoped, tag = 'input window, operand 5, single buffered']
    #allocation9 [shape = 's32[1]{0}', space=sflag, size = 0x4, scoped, tag = 'scoped memory for tpu_custom_call.1']
    #allocation10 [shape = 'u8[16384]{0}', space=vmem, size = 0x4000, scoped, tag = 'input window, operand 7, single buffered']
    #allocation11 [shape = 'u8[4096]{0}', space=vmem, size = 0x1000, scoped, tag = 'output window, operand 0, single buffered']
    %13 = vsyncpa [#allocation3], 0
    %14 = vsyncpa [#allocation6], 0
    %15 = vsyncpa [#allocation9], 0
    %16 = vsyncpa [#allocation4], 0
    // Predicated region
    $region2: #{tpu_custom_call.1} parent=1 // pred_check
      _
    $region3: #{tpu_custom_call.1} parent=1 // pred_check_branch
      %18 = sbr.rel (0) target = $region5
    $region4: #{tpu_custom_call.1} parent=1 // pred_region
      _
    $region5: #{tpu_custom_call.1} parent=1 // pred_fallthru
      _
    // Predicated region
    $region6: #{tpu_custom_call.1} parent=1 // pred_check
      _
    $region7: #{tpu_custom_call.1} parent=1 // pred_check_branch
      %20 = sbr.rel (0) target = $region9
    $region8: #{tpu_custom_call.1} parent=1 // pred_region
      %s22 = ssub.s32 256, 256
      %23 = vsyncadd [#allocation3], %s22
      %s24 = sshll.u32 [#allocation2], 4
      %s25 = int_to_ptr.vmem [resolvable:$true] %s24
      %30 = dma.hbm_to_vmem [thread:$0]  %s1, 256, %s25, [#allocation3], 128, 128, 8
    $region9: #{tpu_custom_call.1} parent=1 // pred_fallthru
      _
    // Predicated region
    $region10: #{tpu_custom_call.1} parent=1 // pred_check
      _
    $region11: #{tpu_custom_call.1} parent=1 // pred_check_branch
      %32 = sbr.rel (0) target = $region13
    $region12: #{tpu_custom_call.1} parent=1 // pred_region
      %s34 = ssub.s32 256, 256
      %35 = vsyncadd [#allocation6], %s34
      %s36 = sshll.u32 [#allocation5], 4
      %s37 = int_to_ptr.vmem [resolvable:$true] %s36
      %42 = dma.hbm_to_vmem [thread:$0]  %s2, 256, %s37, [#allocation6], 128, 128, 8
    $region13: #{tpu_custom_call.1} parent=1 // pred_fallthru
      _
    // Predicated region
    $region14: #{tpu_custom_call.1} parent=1 // pred_check
      _
    $region15: #{tpu_custom_call.1} parent=1 // pred_check_branch
      %44 = sbr.rel (0) target = $region17
    $region16: #{tpu_custom_call.1} parent=1 // pred_region
      _
    $region17: #{tpu_custom_call.1} parent=1 // pred_fallthru
      _
    // Predicated region
    $region18: #{tpu_custom_call.1} parent=1 // pred_check
      _
    $region19: #{tpu_custom_call.1} parent=1 // pred_check_branch
      %46 = sbr.rel (0) target = $region21
    $region20: #{tpu_custom_call.1} parent=1 // pred_region
      %s48 = ssub.s32 512, 512
      %49 = vsyncadd [#allocation6], %s48
      %s50 = sshll.u32 [#allocation7], 4
      %s51 = int_to_ptr.vmem [resolvable:$true] %s50
      %56 = dma.hbm_to_vmem [thread:$0]  %s4, 512, %s51, [#allocation6], 128, 128, 8
    $region21: #{tpu_custom_call.1} parent=1 // pred_fallthru
      _
    // Predicated region
    $region22: #{tpu_custom_call.1} parent=1 // pred_check
      _
    $region23: #{tpu_custom_call.1} parent=1 // pred_check_branch
      %58 = sbr.rel (0) target = $region25
    $region24: #{tpu_custom_call.1} parent=1 // pred_region
      %s60 = ssub.s32 512, 512
      %61 = vsyncadd [#allocation9], %s60
      %s62 = sshll.u32 [#allocation8], 4
      %s63 = int_to_ptr.vmem [resolvable:$true] %s62
      %68 = dma.hbm_to_vmem [thread:$0]  %s5, 512, %s63, [#allocation9], 128, 128, 8
    $region25: #{tpu_custom_call.1} parent=1 // pred_fallthru
      _
    // Predicated region
    $region26: #{tpu_custom_call.1} parent=1 // pred_check
      _
    $region27: #{tpu_custom_call.1} parent=1 // pred_check_branch
      %70 = sbr.rel (0) target = $region29
    $region28: #{tpu_custom_call.1} parent=1 // pred_region
      _
    $region29: #{tpu_custom_call.1} parent=1 // pred_fallthru
      _
    // Predicated region
    $region30: #{tpu_custom_call.1} parent=1 // pred_check
      _
    $region31: #{tpu_custom_call.1} parent=1 // pred_check_branch
      %72 = sbr.rel (0) target = $region33
    $region32: #{tpu_custom_call.1} parent=1 // pred_region
      %s74 = ssub.s32 512, 512
      %75 = vsyncadd [#allocation9], %s74
      %s76 = sshll.u32 [#allocation10], 4
      %s77 = int_to_ptr.vmem [resolvable:$true] %s76
      %82 = dma.hbm_to_vmem [thread:$0]  %s7, 512, %s77, [#allocation9], 128, 128, 8
    $region33: #{tpu_custom_call.1} parent=1 // pred_fallthru
      _
    // Predicated region
    $region34: #{tpu_custom_call.1} parent=1 // pred_check
      _
    $region35: #{tpu_custom_call.1} parent=1 // pred_check_branch
      %84 = sbr.rel (0) target = $region37
    $region36: #{tpu_custom_call.1} parent=1 // pred_region
      %85 = dma.done [#allocation3], 256
    $region37: #{tpu_custom_call.1} parent=1 // pred_fallthru
      _
    // Predicated region
    $region38: #{tpu_custom_call.1} parent=1 // pred_check
      _
    $region39: #{tpu_custom_call.1} parent=1 // pred_check_branch
      %87 = sbr.rel (0) target = $region41
    $region40: #{tpu_custom_call.1} parent=1 // pred_region
      %88 = dma.done [#allocation6], 256
    $region41: #{tpu_custom_call.1} parent=1 // pred_fallthru
      _
    // Predicated region
    $region42: #{tpu_custom_call.1} parent=1 // pred_check
      _
    $region43: #{tpu_custom_call.1} parent=1 // pred_check_branch
      %90 = sbr.rel (0) target = $region45
    $region44: #{tpu_custom_call.1} parent=1 // pred_region
      %91 = dma.done [#allocation6], 512
    $region45: #{tpu_custom_call.1} parent=1 // pred_fallthru
      _
    // Predicated region
    $region46: #{tpu_custom_call.1} parent=1 // pred_check
      _
    $region47: #{tpu_custom_call.1} parent=1 // pred_check_branch
      %93 = sbr.rel (0) target = $region49
    $region48: #{tpu_custom_call.1} parent=1 // pred_region
      %94 = dma.done [#allocation9], 512
    $region49: #{tpu_custom_call.1} parent=1 // pred_fallthru
      _
    // Predicated region
    $region50: #{tpu_custom_call.1} parent=1 // pred_check
      _
    $region51: #{tpu_custom_call.1} parent=1 // pred_check_branch
      %96 = sbr.rel (0) target = $region53
    $region52: #{tpu_custom_call.1} parent=1 // pred_region
      %97 = dma.done [#allocation9], 512
    $region53: #{tpu_custom_call.1} parent=1 // pred_fallthru
      _
    %v98 = vld [vmem:[%s0] sm:$0xff]
    %v99 = vld [vmem:[%s0 + $0x8] sm:$0xff]
    %v100 = vld [vmem:[%s0 + $0x10] sm:$0xff]
    %v101 = vld [vmem:[%s0 + $0x18] sm:$0xff]
    %v102 = vld [vmem:[%s0 + $0x20] sm:$0xff]
    %v103 = vld [vmem:[%s0 + $0x28] sm:$0xff]
    %v104 = vld [vmem:[%s0 + $0x30] sm:$0xff]
    %v105 = vld [vmem:[%s0 + $0x38] sm:$0xff]
    %v106 = vld [vmem:[%s3] sm:$0xff]
    %v107 = vld [vmem:[%s3 + $0x8] sm:$0xff]
    %v108 = vld [vmem:[%s3 + $0x10] sm:$0xff]
    %v109 = vld [vmem:[%s3 + $0x18] sm:$0xff]
    %v110 = vld [vmem:[%s3 + $0x20] sm:$0xff]
    %v111 = vld [vmem:[%s3 + $0x28] sm:$0xff]
    %v112 = vld [vmem:[%s3 + $0x30] sm:$0xff]
    %v113 = vld [vmem:[%s3 + $0x38] sm:$0xff]
    %v114 = vld [vmem:[%s3 + $0x40] sm:$0xff]
    %v115 = vld [vmem:[%s3 + $0x48] sm:$0xff]
    %v116 = vld [vmem:[%s3 + $0x50] sm:$0xff]
    %v117 = vld [vmem:[%s3 + $0x58] sm:$0xff]
    %v118 = vld [vmem:[%s6] sm:$0x7]
    %v120 = vlaneseq
    %v121 = vshrl.u32 %v120, 7
    %v122 = vsub.s32 0, %v121
    %v123 = vrot.slane %v118, %v122
    %v124 = vlaneseq
    %v125 = vshrl.u32 %v124, 7
    %v126 = vsub.s32 1, %v125
    %v127 = vrot.slane %v118, %v126
    %v128 = vlaneseq
    %v129 = vshrl.u32 %v128, 7
    %v130 = vsub.s32 2, %v129
    %v131 = vrot.slane %v118, %v130
    %vm135 = vcmask 261120
    %v137 = vsel %vm135, %v98, 0
    %v140 = vsel %vm135, %v99, 0
    %v143 = vsel %vm135, %v100, 0
    %v146 = vsel %vm135, %v101, 0
    %v149 = vsel %vm135, %v102, 0
    %v152 = vsel %vm135, %v103, 0
    %v155 = vsel %vm135, %v104, 0
    %v158 = vsel %vm135, %v105, 0
    %160 = vmatprep.subr.mxu0 %v107
    %161 = vmatpush1.msra.mxu0 %v106
    %162 = vmatprep.subr.mxu0 %v110
    %163 = vmatpush1.msra.mxu0 %v109
    %164 = vmatprep.subr.mxu0 %v113
    %165 = vmatpush1.msra.mxu0 %v112
    %166 = vmatprep.subr.mxu0 %v116
    %167 = vmatpush1.msra.mxu0 %v115
    %168 = vmatprep.subr.mxu0 0.0
    %169 = vmatpush1.msra.mxu0 0.0
    %170 = vmatprep.subr.mxu0 0.0
    %171 = vmatpush1.msra.mxu0 0.0
    %172 = vmatprep.subr.mxu0 0.0
    %173 = vmatpush1.msra.mxu0 0.0
    %174 = vmatprep.subr.mxu0 0.0
    %175 = vmatpush1.msra.mxu0 0.0
    %176 = vmatprep.subr.mxu0 0.0
    %177 = vmatpush1.msra.mxu0 0.0
    %178 = vmatprep.subr.mxu0 0.0
    %179 = vmatpush1.msra.mxu0 0.0
    %180 = vmatprep.subr.mxu0 0.0
    %181 = vmatpush1.msra.mxu0 0.0
    %182 = vmatprep.subr.mxu0 0.0
    %183 = vmatpush1.msra.mxu0 0.0
    %184 = vmatprep.subr.mxu0 0.0
    %185 = vmatpush1.msra.mxu0 0.0
    %186 = vmatprep.subr.mxu0 0.0
    %187 = vmatpush1.msra.mxu0 0.0
    %188 = vmatprep.subr.mxu0 0.0
    %189 = vmatpush1.msra.mxu0 0.0
    %190 = vmatprep.subr.mxu0 0.0
    %191 = vmatpush1.msra.mxu0 0.0
    %192 = vmatprep.subr.mxu0 0.0
    %193 = vmatpush1.msra.mxu0 0.0
    %194 = vmatprep.subr.mxu0 0.0
    %195 = vmatpush1.msra.mxu0 0.0
    %196 = vmatprep.subr.mxu0 0.0
    %197 = vmatpush1.msra.mxu0 0.0
    %198 = vmatprep.subr.mxu0 0.0
    %199 = vmatpush1.msra.mxu0 0.0
    %200 = vmatprep.subr.mxu0 0.0
    %201 = vmatpush1.msra.mxu0 0.0
    %202 = vmatprep.subr.mxu0 0.0
    %203 = vmatpush1.msra.mxu0 0.0
    %204 = vmatprep.subr.mxu0 0.0
    %205 = vmatpush1.msra.mxu0 0.0
    %206 = vmatprep.subr.mxu0 0.0
    %207 = vmatpush1.msra.mxu0 0.0
    %208 = vmatprep.subr.mxu0 0.0
    %209 = vmatpush1.msra.mxu0 0.0
    %210 = vmatprep.subr.mxu0 0.0
    %211 = vmatpush1.msra.mxu0 0.0
    %212 = vmatprep.subr.mxu0 0.0
    %213 = vmatpush1.msra.mxu0 0.0
    %214 = vmatprep.subr.mxu0 0.0
    %215 = vmatpush1.msra.mxu0 0.0
    %216 = vmatprep.subr.mxu0 0.0
    %217 = vmatpush1.msra.mxu0 0.0
    %218 = vmatprep.subr.mxu0 0.0
    %219 = vmatpush1.msra.mxu0 0.0
    %220 = vmatprep.subr.mxu0 0.0
    %221 = vmatpush1.msra.mxu0 0.0
    %222 = vmatprep.subr.mxu0 0.0
    %223 = vmatpush1.msra.mxu0 0.0
    %224 = vmatprep.mubr.f32.mxu0 0.0
    %225 = vmatmul.mubr.f32.gmra.mrb[0].mxu0 %v137
    %v226 = vpop.f32.mrb[0].mxu0
    %v227 = vadd.f32 %v123, %v226
    %v228 = vpop.f32.mrb[0].mxu0
    %v229 = vadd.f32 %v127, %v228
    %230 = vmatprep.mubr.f32.mxu0 0.0
    %231 = vmatmul.mubr.f32.gmra.mrb[0].mxu0 %v140
    %v232 = vpop.f32.mrb[0].mxu0
    %v233 = vadd.f32 %v123, %v232
    %v234 = vpop.f32.mrb[0].mxu0
    %v235 = vadd.f32 %v127, %v234
    %236 = vmatprep.mubr.f32.mxu0 0.0
    %237 = vmatmul.mubr.f32.gmra.mrb[0].mxu0 %v143
    %v238 = vpop.f32.mrb[0].mxu0
    %v239 = vadd.f32 %v123, %v238
    %v240 = vpop.f32.mrb[0].mxu0
    %v241 = vadd.f32 %v127, %v240
    %242 = vmatprep.mubr.f32.mxu0 0.0
    %243 = vmatmul.mubr.f32.gmra.mrb[0].mxu0 %v146
    %v244 = vpop.f32.mrb[0].mxu0
    %v245 = vadd.f32 %v123, %v244
    %v246 = vpop.f32.mrb[0].mxu0
    %v247 = vadd.f32 %v127, %v246
    %248 = vmatprep.mubr.f32.mxu0 0.0
    %249 = vmatmul.mubr.f32.gmra.mrb[0].mxu0 %v149
    %v250 = vpop.f32.mrb[0].mxu0
    %v251 = vadd.f32 %v123, %v250
    %v252 = vpop.f32.mrb[0].mxu0
    %v253 = vadd.f32 %v127, %v252
    %254 = vmatprep.mubr.f32.mxu0 0.0
    %255 = vmatmul.mubr.f32.gmra.mrb[0].mxu0 %v152
    %v256 = vpop.f32.mrb[0].mxu0
    %v257 = vadd.f32 %v123, %v256
    %v258 = vpop.f32.mrb[0].mxu0
    %v259 = vadd.f32 %v127, %v258
    %260 = vmatprep.mubr.f32.mxu0 0.0
    %261 = vmatmul.mubr.f32.gmra.mrb[0].mxu0 %v155
    %v262 = vpop.f32.mrb[0].mxu0
    %v263 = vadd.f32 %v123, %v262
    %v264 = vpop.f32.mrb[0].mxu0
    %v265 = vadd.f32 %v127, %v264
    %266 = vmatprep.mubr.f32.mxu0 0.0
    %267 = vmatmul.mubr.f32.gmra.mrb[0].mxu0 %v158
    %v268 = vpop.f32.mrb[0].mxu0
    %v269 = vadd.f32 %v123, %v268
    %v270 = vpop.f32.mrb[0].mxu0
    %v271 = vadd.f32 %v127, %v270
    %272 = vdwg.mxu0
    %273 = vmatprep.subr.mxu0 0.0
    %274 = vmatpush1.msra.mxu0 %v108
    %275 = vmatprep.subr.mxu0 0.0
    %276 = vmatpush1.msra.mxu0 %v111
    %277 = vmatprep.subr.mxu0 0.0
    %278 = vmatpush1.msra.mxu0 %v114
    %279 = vmatprep.subr.mxu0 0.0
    %280 = vmatpush1.msra.mxu0 %v117
    %281 = vmatprep.subr.mxu0 0.0
    %282 = vmatpush1.msra.mxu0 0.0
    %283 = vmatprep.subr.mxu0 0.0
    %284 = vmatpush1.msra.mxu0 0.0
    %285 = vmatprep.subr.mxu0 0.0
    %286 = vmatpush1.msra.mxu0 0.0
    %287 = vmatprep.subr.mxu0 0.0
    %288 = vmatpush1.msra.mxu0 0.0
    %289 = vmatprep.subr.mxu0 0.0
    %290 = vmatpush1.msra.mxu0 0.0
    %291 = vmatprep.subr.mxu0 0.0
    %292 = vmatpush1.msra.mxu0 0.0
    %293 = vmatprep.subr.mxu0 0.0
    %294 = vmatpush1.msra.mxu0 0.0
    %295 = vmatprep.subr.mxu0 0.0
    %296 = vmatpush1.msra.mxu0 0.0
    %297 = vmatprep.subr.mxu0 0.0
    %298 = vmatpush1.msra.mxu0 0.0
    %299 = vmatprep.subr.mxu0 0.0
    %300 = vmatpush1.msra.mxu0 0.0
    %301 = vmatprep.subr.mxu0 0.0
    %302 = vmatpush1.msra.mxu0 0.0
    %303 = vmatprep.subr.mxu0 0.0
    %304 = vmatpush1.msra.mxu0 0.0
    %305 = vmatprep.subr.mxu0 0.0
    %306 = vmatpush1.msra.mxu0 0.0
    %307 = vmatprep.subr.mxu0 0.0
    %308 = vmatpush1.msra.mxu0 0.0
    %309 = vmatprep.subr.mxu0 0.0
    %310 = vmatpush1.msra.mxu0 0.0
    %311 = vmatprep.subr.mxu0 0.0
    %312 = vmatpush1.msra.mxu0 0.0
    %313 = vmatprep.subr.mxu0 0.0
    %314 = vmatpush1.msra.mxu0 0.0
    %315 = vmatprep.subr.mxu0 0.0
    %316 = vmatpush1.msra.mxu0 0.0
    %317 = vmatprep.subr.mxu0 0.0
    %318 = vmatpush1.msra.mxu0 0.0
    %319 = vmatprep.subr.mxu0 0.0
    %320 = vmatpush1.msra.mxu0 0.0
    %321 = vmatprep.subr.mxu0 0.0
    %322 = vmatpush1.msra.mxu0 0.0
    %323 = vmatprep.subr.mxu0 0.0
    %324 = vmatpush1.msra.mxu0 0.0
    %325 = vmatprep.subr.mxu0 0.0
    %326 = vmatpush1.msra.mxu0 0.0
    %327 = vmatprep.subr.mxu0 0.0
    %328 = vmatpush1.msra.mxu0 0.0
    %329 = vmatprep.subr.mxu0 0.0
    %330 = vmatpush1.msra.mxu0 0.0
    %331 = vmatprep.subr.mxu0 0.0
    %332 = vmatpush1.msra.mxu0 0.0
    %333 = vmatprep.subr.mxu0 0.0
    %334 = vmatpush1.msra.mxu0 0.0
    %335 = vmatprep.subr.mxu0 0.0
    %336 = vmatpush1.msra.mxu0 0.0
    %337 = vmatprep.mubr.f32.mxu0 0.0
    %338 = vmatmul.mubr.f32.gmra.mrb[0].mxu0 %v137
    %v339 = vpop.f32.mrb[0].mxu0
    %v340 = vadd.f32 %v131, %v339
    %v341 = vpop.f32.mrb[0].mxu0
    %342 = vmatprep.mubr.f32.mxu0 0.0
    %343 = vmatmul.mubr.f32.gmra.mrb[0].mxu0 %v140
    %v344 = vpop.f32.mrb[0].mxu0
    %v345 = vadd.f32 %v131, %v344
    %v346 = vpop.f32.mrb[0].mxu0
    %347 = vmatprep.mubr.f32.mxu0 0.0
    %348 = vmatmul.mubr.f32.gmra.mrb[0].mxu0 %v143
    %v349 = vpop.f32.mrb[0].mxu0
    %v350 = vadd.f32 %v131, %v349
    %v351 = vpop.f32.mrb[0].mxu0
    %352 = vmatprep.mubr.f32.mxu0 0.0
    %353 = vmatmul.mubr.f32.gmra.mrb[0].mxu0 %v146
    %v354 = vpop.f32.mrb[0].mxu0
    %v355 = vadd.f32 %v131, %v354
    %v356 = vpop.f32.mrb[0].mxu0
    %357 = vmatprep.mubr.f32.mxu0 0.0
    %358 = vmatmul.mubr.f32.gmra.mrb[0].mxu0 %v149
    %v359 = vpop.f32.mrb[0].mxu0
    %v360 = vadd.f32 %v131, %v359
    %v361 = vpop.f32.mrb[0].mxu0
    %362 = vmatprep.mubr.f32.mxu0 0.0
    %363 = vmatmul.mubr.f32.gmra.mrb[0].mxu0 %v152
    %v364 = vpop.f32.mrb[0].mxu0
    %v365 = vadd.f32 %v131, %v364
    %v366 = vpop.f32.mrb[0].mxu0
    %367 = vmatprep.mubr.f32.mxu0 0.0
    %368 = vmatmul.mubr.f32.gmra.mrb[0].mxu0 %v155
    %v369 = vpop.f32.mrb[0].mxu0
    %v370 = vadd.f32 %v131, %v369
    %v371 = vpop.f32.mrb[0].mxu0
    %372 = vmatprep.mubr.f32.mxu0 0.0
    %373 = vmatmul.mubr.f32.gmra.mrb[0].mxu0 %v158
    %v374 = vpop.f32.mrb[0].mxu0
    %v375 = vadd.f32 %v131, %v374
    %v376 = vpop.f32.mrb[0].mxu0
    %377 = vdwg.mxu0
    %v378 = vld [vmem:[#allocation7] sm:$0xff]
    %v379 = vld [vmem:[#allocation7 + $0x8] sm:$0xff]
    %v380 = vld [vmem:[#allocation7 + $0x10] sm:$0xff]
    %v381 = vld [vmem:[#allocation7 + $0x18] sm:$0xff]
    %v382 = vld [vmem:[#allocation8] sm:$0xff]
    %v383 = vld [vmem:[#allocation8 + $0x8] sm:$0xff]
    %v384 = vld [vmem:[#allocation8 + $0x10] sm:$0xff]
    %v385 = vld [vmem:[#allocation8 + $0x18] sm:$0xff]
    %v386 = vld [vmem:[#allocation2] sm:$0xff]
    %v387 = vld [vmem:[#allocation5] sm:$0xff]
    %s388 = scalar_lea.vmem [#allocation2], 8
    %v389 = vld [vmem:[%s388] sm:$0xff]
    %s390 = scalar_lea.vmem [#allocation5], 8
    %v391 = vld [vmem:[%s390] sm:$0xff]
    %v393 = vsel %vm135, %v386, 0
    %395 = vmatprep.subr.mxu0 0.0
    %396 = vmatpush1.msra.mxu0 %v378
    %397 = vmatprep.subr.mxu0 0.0
    %398 = vmatpush1.msra.mxu0 %v379
    %399 = vmatprep.subr.mxu0 0.0
    %400 = vmatpush1.msra.mxu0 %v380
    %401 = vmatprep.subr.mxu0 0.0
    %402 = vmatpush1.msra.mxu0 %v381
    %403 = vmatprep.subr.mxu0 0.0
    %404 = vmatpush1.msra.mxu0 0.0
    %405 = vmatprep.subr.mxu0 0.0
    %406 = vmatpush1.msra.mxu0 0.0
    %407 = vmatprep.subr.mxu0 0.0
    %408 = vmatpush1.msra.mxu0 0.0
    %409 = vmatprep.subr.mxu0 0.0
    %410 = vmatpush1.msra.mxu0 0.0
    %411 = vmatprep.subr.mxu0 0.0
    %412 = vmatpush1.msra.mxu0 0.0
    %413 = vmatprep.subr.mxu0 0.0
    %414 = vmatpush1.msra.mxu0 0.0
    %415 = vmatprep.subr.mxu0 0.0
    %416 = vmatpush1.msra.mxu0 0.0
    %417 = vmatprep.subr.mxu0 0.0
    %418 = vmatpush1.msra.mxu0 0.0
    %419 = vmatprep.subr.mxu0 0.0
    %420 = vmatpush1.msra.mxu0 0.0
    %421 = vmatprep.subr.mxu0 0.0
    %422 = vmatpush1.msra.mxu0 0.0
    %423 = vmatprep.subr.mxu0 0.0
    %424 = vmatpush1.msra.mxu0 0.0
    %425 = vmatprep.subr.mxu0 0.0
    %426 = vmatpush1.msra.mxu0 0.0
    %427 = vmatprep.subr.mxu0 0.0
    %428 = vmatpush1.msra.mxu0 0.0
    %429 = vmatprep.subr.mxu0 0.0
    %430 = vmatpush1.msra.mxu0 0.0
    %431 = vmatprep.subr.mxu0 0.0
    %432 = vmatpush1.msra.mxu0 0.0
    %433 = vmatprep.subr.mxu0 0.0
    %434 = vmatpush1.msra.mxu0 0.0
    %435 = vmatprep.subr.mxu0 0.0
    %436 = vmatpush1.msra.mxu0 0.0
    %437 = vmatprep.subr.mxu0 0.0
    %438 = vmatpush1.msra.mxu0 0.0
    %439 = vmatprep.subr.mxu0 0.0
    %440 = vmatpush1.msra.mxu0 0.0
    %441 = vmatprep.subr.mxu0 0.0
    %442 = vmatpush1.msra.mxu0 0.0
    %443 = vmatprep.subr.mxu0 0.0
    %444 = vmatpush1.msra.mxu0 0.0
    %445 = vmatprep.subr.mxu0 0.0
    %446 = vmatpush1.msra.mxu0 0.0
    %447 = vmatprep.subr.mxu0 0.0
    %448 = vmatpush1.msra.mxu0 0.0
    %449 = vmatprep.subr.mxu0 0.0
    %450 = vmatpush1.msra.mxu0 0.0
    %451 = vmatprep.subr.mxu0 0.0
    %452 = vmatpush1.msra.mxu0 0.0
    %453 = vmatprep.subr.mxu0 0.0
    %454 = vmatpush1.msra.mxu0 0.0
    %455 = vmatprep.subr.mxu0 0.0
    %456 = vmatpush1.msra.mxu0 0.0
    %457 = vmatprep.subr.mxu0 0.0
    %458 = vmatpush1.msra.mxu0 0.0
    %459 = vmatprep.mubr.f32.mxu0 0.0
    %460 = vmatmul.mubr.f32.gmra.mrb[0].mxu0 %v393
    %v461 = vpop.f32.mrb[0].mxu0
    %v462 = vadd.f32 0.0, %v461
    %v463 = vpop.f32.mrb[0].mxu0
    %464 = vdwg.mxu0
    %v465 = vadd.f32 %v227, %v462
    %v466 = vxor.u32 %v465, 2147483648
    %v467 = vmul.f32 %v466, 1.442695
    %v468 = vpow.pop %v467
    %v469 = vadd.f32 %v468, 1.0
    %v470 = vrcp.pop %v469
    %v471 = vmul.f32 1.0, %v470
    %v472 = vtanh.pop %v465
    %474 = vrot.lane.b32.xlu0 %v387, 32
    %v475 = vpop.permute.xlu0 %474
    %v477 = vmul.f32 %v471, %v475
    %479 = vrot.lane.b32.xlu0 %v472, 64
    %v480 = vpop.permute.xlu0 %479
    %v482 = vmul.f32 %v471, %v480
    %484 = vrot.lane.b32.xlu0 %v482, 32
    %v485 = vpop.permute.xlu0 %484
    %v487 = vadd.f32 %v477, %v485
    %v488 = vtanh.pop %v487
    %490 = vrot.lane.b32.xlu0 %v488, 64
    %v491 = vpop.permute.xlu0 %490
    %v493 = vmul.f32 %v471, %v491
    %v495 = vsel %vm135, %v389, 0
    %497 = vmatprep.subr.mxu0 0.0
    %498 = vmatpush1.msra.mxu0 %v382
    %499 = vmatprep.subr.mxu0 0.0
    %500 = vmatpush1.msra.mxu0 %v383
    %501 = vmatprep.subr.mxu0 0.0
    %502 = vmatpush1.msra.mxu0 %v384
    %503 = vmatprep.subr.mxu0 0.0
    %504 = vmatpush1.msra.mxu0 %v385
    %505 = vmatprep.subr.mxu0 0.0
    %506 = vmatpush1.msra.mxu0 0.0
    %507 = vmatprep.subr.mxu0 0.0
    %508 = vmatpush1.msra.mxu0 0.0
    %509 = vmatprep.subr.mxu0 0.0
    %510 = vmatpush1.msra.mxu0 0.0
    %511 = vmatprep.subr.mxu0 0.0
    %512 = vmatpush1.msra.mxu0 0.0
    %513 = vmatprep.subr.mxu0 0.0
    %514 = vmatpush1.msra.mxu0 0.0
    %515 = vmatprep.subr.mxu0 0.0
    %516 = vmatpush1.msra.mxu0 0.0
    %517 = vmatprep.subr.mxu0 0.0
    %518 = vmatpush1.msra.mxu0 0.0
    %519 = vmatprep.subr.mxu0 0.0
    %520 = vmatpush1.msra.mxu0 0.0
    %521 = vmatprep.subr.mxu0 0.0
    %522 = vmatpush1.msra.mxu0 0.0
    %523 = vmatprep.subr.mxu0 0.0
    %524 = vmatpush1.msra.mxu0 0.0
    %525 = vmatprep.subr.mxu0 0.0
    %526 = vmatpush1.msra.mxu0 0.0
    %527 = vmatprep.subr.mxu0 0.0
    %528 = vmatpush1.msra.mxu0 0.0
    %529 = vmatprep.subr.mxu0 0.0
    %530 = vmatpush1.msra.mxu0 0.0
    %531 = vmatprep.subr.mxu0 0.0
    %532 = vmatpush1.msra.mxu0 0.0
    %533 = vmatprep.subr.mxu0 0.0
    %534 = vmatpush1.msra.mxu0 0.0
    %535 = vmatprep.subr.mxu0 0.0
    %536 = vmatpush1.msra.mxu0 0.0
    %537 = vmatprep.subr.mxu0 0.0
    %538 = vmatpush1.msra.mxu0 0.0
    %539 = vmatprep.subr.mxu0 0.0
    %540 = vmatpush1.msra.mxu0 0.0
    %541 = vmatprep.subr.mxu0 0.0
    %542 = vmatpush1.msra.mxu0 0.0
    %543 = vmatprep.subr.mxu0 0.0
    %544 = vmatpush1.msra.mxu0 0.0
    %545 = vmatprep.subr.mxu0 0.0
    %546 = vmatpush1.msra.mxu0 0.0
    %547 = vmatprep.subr.mxu0 0.0
    %548 = vmatpush1.msra.mxu0 0.0
    %549 = vmatprep.subr.mxu0 0.0
    %550 = vmatpush1.msra.mxu0 0.0
    %551 = vmatprep.subr.mxu0 0.0
    %552 = vmatpush1.msra.mxu0 0.0
    %553 = vmatprep.subr.mxu0 0.0
    %554 = vmatpush1.msra.mxu0 0.0
    %555 = vmatprep.subr.mxu0 0.0
    %556 = vmatpush1.msra.mxu0 0.0
    %557 = vmatprep.subr.mxu0 0.0
    %558 = vmatpush1.msra.mxu0 0.0
    %559 = vmatprep.subr.mxu0 0.0
    %560 = vmatpush1.msra.mxu0 0.0
    %561 = vmatprep.mubr.f32.mxu0 0.0
    %562 = vmatmul.mubr.f32.gmra.mrb[0].mxu0 %v495
    %v563 = vpop.f32.mrb[0].mxu0
    %v564 = vadd.f32 0.0, %v563
    %v565 = vpop.f32.mrb[0].mxu0
    %566 = vdwg.mxu0
    %v567 = vadd.f32 %v271, %v564
    %v568 = vxor.u32 %v567, 2147483648
    %v569 = vmul.f32 %v568, 1.442695
    %v570 = vpow.pop %v569
    %v571 = vadd.f32 %v570, 1.0
    %v572 = vrcp.pop %v571
    %v573 = vmul.f32 1.0, %v572
    %v574 = vtanh.pop %v567
    %576 = vrot.lane.b32.xlu0 %v391, 32
    %v577 = vpop.permute.xlu0 %576
    %v579 = vmul.f32 %v573, %v577
    %581 = vrot.lane.b32.xlu0 %v574, 64
    %v582 = vpop.permute.xlu0 %581
    %v584 = vmul.f32 %v573, %v582
    %586 = vrot.lane.b32.xlu0 %v584, 32
    %v587 = vpop.permute.xlu0 %586
    %v589 = vadd.f32 %v579, %v587
    %v590 = vtanh.pop %v589
    %592 = vrot.lane.b32.xlu0 %v590, 64
    %v593 = vpop.permute.xlu0 %592
    %v595 = vmul.f32 %v573, %v593
    %597 = vrot.lane.b32.xlu0 %v493, 32
    %v598 = vpop.permute.xlu0 %597
    %v599 = vsel %vm135, %v598, 0
    %601 = vmatprep.subr.mxu0 0.0
    %602 = vmatpush1.msra.mxu0 %v378
    %603 = vmatprep.subr.mxu0 0.0
    %604 = vmatpush1.msra.mxu0 %v379
    %605 = vmatprep.subr.mxu0 0.0
    %606 = vmatpush1.msra.mxu0 %v380
    %607 = vmatprep.subr.mxu0 0.0
    %608 = vmatpush1.msra.mxu0 %v381
    %609 = vmatprep.subr.mxu0 0.0
    %610 = vmatpush1.msra.mxu0 0.0
    %611 = vmatprep.subr.mxu0 0.0
    %612 = vmatpush1.msra.mxu0 0.0
    %613 = vmatprep.subr.mxu0 0.0
    %614 = vmatpush1.msra.mxu0 0.0
    %615 = vmatprep.subr.mxu0 0.0
    %616 = vmatpush1.msra.mxu0 0.0
    %617 = vmatprep.subr.mxu0 0.0
    %618 = vmatpush1.msra.mxu0 0.0
    %619 = vmatprep.subr.mxu0 0.0
    %620 = vmatpush1.msra.mxu0 0.0
    %621 = vmatprep.subr.mxu0 0.0
    %622 = vmatpush1.msra.mxu0 0.0
    %623 = vmatprep.subr.mxu0 0.0
    %624 = vmatpush1.msra.mxu0 0.0
    %625 = vmatprep.subr.mxu0 0.0
    %626 = vmatpush1.msra.mxu0 0.0
    %627 = vmatprep.subr.mxu0 0.0
    %628 = vmatpush1.msra.mxu0 0.0
    %629 = vmatprep.subr.mxu0 0.0
    %630 = vmatpush1.msra.mxu0 0.0
    %631 = vmatprep.subr.mxu0 0.0
    %632 = vmatpush1.msra.mxu0 0.0
    %633 = vmatprep.subr.mxu0 0.0
    %634 = vmatpush1.msra.mxu0 0.0
    %635 = vmatprep.subr.mxu0 0.0
    %636 = vmatpush1.msra.mxu0 0.0
    %637 = vmatprep.subr.mxu0 0.0
    %638 = vmatpush1.msra.mxu0 0.0
    %639 = vmatprep.subr.mxu0 0.0
    %640 = vmatpush1.msra.mxu0 0.0
    %641 = vmatprep.subr.mxu0 0.0
    %642 = vmatpush1.msra.mxu0 0.0
    %643 = vmatprep.subr.mxu0 0.0
    %644 = vmatpush1.msra.mxu0 0.0
    %645 = vmatprep.subr.mxu0 0.0
    %646 = vmatpush1.msra.mxu0 0.0
    %647 = vmatprep.subr.mxu0 0.0
    %648 = vmatpush1.msra.mxu0 0.0
    %649 = vmatprep.subr.mxu0 0.0
    %650 = vmatpush1.msra.mxu0 0.0
    %651 = vmatprep.subr.mxu0 0.0
    %652 = vmatpush1.msra.mxu0 0.0
    %653 = vmatprep.subr.mxu0 0.0
    %654 = vmatpush1.msra.mxu0 0.0
    %655 = vmatprep.subr.mxu0 0.0
    %656 = vmatpush1.msra.mxu0 0.0
    %657 = vmatprep.subr.mxu0 0.0
    %658 = vmatpush1.msra.mxu0 0.0
    %659 = vmatprep.subr.mxu0 0.0
    %660 = vmatpush1.msra.mxu0 0.0
    %661 = vmatprep.subr.mxu0 0.0
    %662 = vmatpush1.msra.mxu0 0.0
    %663 = vmatprep.subr.mxu0 0.0
    %664 = vmatpush1.msra.mxu0 0.0
    %665 = vmatprep.mubr.f32.mxu0 0.0
    %666 = vmatmul.mubr.f32.gmra.mrb[0].mxu0 %v599
    %v667 = vpop.f32.mrb[0].mxu0
    %v668 = vadd.f32 0.0, %v667
    %v669 = vpop.f32.mrb[0].mxu0
    %670 = vdwg.mxu0
    %v671 = vadd.f32 %v233, %v668
    %v672 = vxor.u32 %v671, 2147483648
    %v673 = vmul.f32 %v672, 1.442695
    %v674 = vpow.pop %v673
    %v675 = vadd.f32 %v674, 1.0
    %v676 = vrcp.pop %v675
    %v677 = vmul.f32 1.0, %v676
    %v678 = vtanh.pop %v671
    %v679 = vmul.f32 %v677, %v487
    %681 = vrot.lane.b32.xlu0 %v678, 64
    %v682 = vpop.permute.xlu0 %681
    %v684 = vmul.f32 %v677, %v682
    %686 = vrot.lane.b32.xlu0 %v684, 32
    %v687 = vpop.permute.xlu0 %686
    %v689 = vadd.f32 %v679, %v687
    %v690 = vtanh.pop %v689
    %692 = vrot.lane.b32.xlu0 %v690, 64
    %v693 = vpop.permute.xlu0 %692
    %v695 = vmul.f32 %v677, %v693
    %697 = vrot.lane.b32.xlu0 %v595, 32
    %v698 = vpop.permute.xlu0 %697
    %v699 = vsel %vm135, %v698, 0
    %701 = vmatprep.subr.mxu0 0.0
    %702 = vmatpush1.msra.mxu0 %v382
    %703 = vmatprep.subr.mxu0 0.0
    %704 = vmatpush1.msra.mxu0 %v383
    %705 = vmatprep.subr.mxu0 0.0
    %706 = vmatpush1.msra.mxu0 %v384
    %707 = vmatprep.subr.mxu0 0.0
    %708 = vmatpush1.msra.mxu0 %v385
    %709 = vmatprep.subr.mxu0 0.0
    %710 = vmatpush1.msra.mxu0 0.0
    %711 = vmatprep.subr.mxu0 0.0
    %712 = vmatpush1.msra.mxu0 0.0
    %713 = vmatprep.subr.mxu0 0.0
    %714 = vmatpush1.msra.mxu0 0.0
    %715 = vmatprep.subr.mxu0 0.0
    %716 = vmatpush1.msra.mxu0 0.0
    %717 = vmatprep.subr.mxu0 0.0
    %718 = vmatpush1.msra.mxu0 0.0
    %719 = vmatprep.subr.mxu0 0.0
    %720 = vmatpush1.msra.mxu0 0.0
    %721 = vmatprep.subr.mxu0 0.0
    %722 = vmatpush1.msra.mxu0 0.0
    %723 = vmatprep.subr.mxu0 0.0
    %724 = vmatpush1.msra.mxu0 0.0
    %725 = vmatprep.subr.mxu0 0.0
    %726 = vmatpush1.msra.mxu0 0.0
    %727 = vmatprep.subr.mxu0 0.0
    %728 = vmatpush1.msra.mxu0 0.0
    %729 = vmatprep.subr.mxu0 0.0
    %730 = vmatpush1.msra.mxu0 0.0
    %731 = vmatprep.subr.mxu0 0.0
    %732 = vmatpush1.msra.mxu0 0.0
    %733 = vmatprep.subr.mxu0 0.0
    %734 = vmatpush1.msra.mxu0 0.0
    %735 = vmatprep.subr.mxu0 0.0
    %736 = vmatpush1.msra.mxu0 0.0
    %737 = vmatprep.subr.mxu0 0.0
    %738 = vmatpush1.msra.mxu0 0.0
    %739 = vmatprep.subr.mxu0 0.0
    %740 = vmatpush1.msra.mxu0 0.0
    %741 = vmatprep.subr.mxu0 0.0
    %742 = vmatpush1.msra.mxu0 0.0
    %743 = vmatprep.subr.mxu0 0.0
    %744 = vmatpush1.msra.mxu0 0.0
    %745 = vmatprep.subr.mxu0 0.0
    %746 = vmatpush1.msra.mxu0 0.0
    %747 = vmatprep.subr.mxu0 0.0
    %748 = vmatpush1.msra.mxu0 0.0
    %749 = vmatprep.subr.mxu0 0.0
    %750 = vmatpush1.msra.mxu0 0.0
    %751 = vmatprep.subr.mxu0 0.0
    %752 = vmatpush1.msra.mxu0 0.0
    %753 = vmatprep.subr.mxu0 0.0
    %754 = vmatpush1.msra.mxu0 0.0
    %755 = vmatprep.subr.mxu0 0.0
    %756 = vmatpush1.msra.mxu0 0.0
    %757 = vmatprep.subr.mxu0 0.0
    %758 = vmatpush1.msra.mxu0 0.0
    %759 = vmatprep.subr.mxu0 0.0
    %760 = vmatpush1.msra.mxu0 0.0
    %761 = vmatprep.subr.mxu0 0.0
    %762 = vmatpush1.msra.mxu0 0.0
    %763 = vmatprep.subr.mxu0 0.0
    %764 = vmatpush1.msra.mxu0 0.0
    %765 = vmatprep.mubr.f32.mxu0 0.0
    %766 = vmatmul.mubr.f32.gmra.mrb[0].mxu0 %v699
    %v767 = vpop.f32.mrb[0].mxu0
    %v768 = vadd.f32 0.0, %v767
    %v769 = vpop.f32.mrb[0].mxu0
    %770 = vdwg.mxu0
    %v771 = vadd.f32 %v265, %v768
    %v772 = vxor.u32 %v771, 2147483648
    %v773 = vmul.f32 %v772, 1.442695
    %v774 = vpow.pop %v773
    %v775 = vadd.f32 %v774, 1.0
    %v776 = vrcp.pop %v775
    %v777 = vmul.f32 1.0, %v776
    %v778 = vtanh.pop %v771
    %v779 = vmul.f32 %v777, %v589
    %781 = vrot.lane.b32.xlu0 %v778, 64
    %v782 = vpop.permute.xlu0 %781
    %v784 = vmul.f32 %v777, %v782
    %786 = vrot.lane.b32.xlu0 %v784, 32
    %v787 = vpop.permute.xlu0 %786
    %v789 = vadd.f32 %v779, %v787
    %v790 = vtanh.pop %v789
    %792 = vrot.lane.b32.xlu0 %v790, 64
    %v793 = vpop.permute.xlu0 %792
    %v795 = vmul.f32 %v777, %v793
    %797 = vrot.lane.b32.xlu0 %v695, 32
    %v798 = vpop.permute.xlu0 %797
    %v799 = vsel %vm135, %v798, 0
    %801 = vmatprep.subr.mxu0 0.0
    %802 = vmatpush1.msra.mxu0 %v378
    %803 = vmatprep.subr.mxu0 0.0
    %804 = vmatpush1.msra.mxu0 %v379
    %805 = vmatprep.subr.mxu0 0.0
    %806 = vmatpush1.msra.mxu0 %v380
    %807 = vmatprep.subr.mxu0 0.0
    %808 = vmatpush1.msra.mxu0 %v381
    %809 = vmatprep.subr.mxu0 0.0
    %810 = vmatpush1.msra.mxu0 0.0
    %811 = vmatprep.subr.mxu0 0.0
    %812 = vmatpush1.msra.mxu0 0.0
    %813 = vmatprep.subr.mxu0 0.0
    %814 = vmatpush1.msra.mxu0 0.0
    %815 = vmatprep.subr.mxu0 0.0
    %816 = vmatpush1.msra.mxu0 0.0
    %817 = vmatprep.subr.mxu0 0.0
    %818 = vmatpush1.msra.mxu0 0.0
    %819 = vmatprep.subr.mxu0 0.0
    %820 = vmatpush1.msra.mxu0 0.0
    %821 = vmatprep.subr.mxu0 0.0
    %822 = vmatpush1.msra.mxu0 0.0
    %823 = vmatprep.subr.mxu0 0.0
    %824 = vmatpush1.msra.mxu0 0.0
    %825 = vmatprep.subr.mxu0 0.0
    %826 = vmatpush1.msra.mxu0 0.0
    %827 = vmatprep.subr.mxu0 0.0
    %828 = vmatpush1.msra.mxu0 0.0
    %829 = vmatprep.subr.mxu0 0.0
    %830 = vmatpush1.msra.mxu0 0.0
    %831 = vmatprep.subr.mxu0 0.0
    %832 = vmatpush1.msra.mxu0 0.0
    %833 = vmatprep.subr.mxu0 0.0
    %834 = vmatpush1.msra.mxu0 0.0
    %835 = vmatprep.subr.mxu0 0.0
    %836 = vmatpush1.msra.mxu0 0.0
    %837 = vmatprep.subr.mxu0 0.0
    %838 = vmatpush1.msra.mxu0 0.0
    %839 = vmatprep.subr.mxu0 0.0
    %840 = vmatpush1.msra.mxu0 0.0
    %841 = vmatprep.subr.mxu0 0.0
    %842 = vmatpush1.msra.mxu0 0.0
    %843 = vmatprep.subr.mxu0 0.0
    %844 = vmatpush1.msra.mxu0 0.0
    %845 = vmatprep.subr.mxu0 0.0
    %846 = vmatpush1.msra.mxu0 0.0
    %847 = vmatprep.subr.mxu0 0.0
    %848 = vmatpush1.msra.mxu0 0.0
    %849 = vmatprep.subr.mxu0 0.0
    %850 = vmatpush1.msra.mxu0 0.0
    %851 = vmatprep.subr.mxu0 0.0
    %852 = vmatpush1.msra.mxu0 0.0
    %853 = vmatprep.subr.mxu0 0.0
    %854 = vmatpush1.msra.mxu0 0.0
    %855 = vmatprep.subr.mxu0 0.0
    %856 = vmatpush1.msra.mxu0 0.0
    %857 = vmatprep.subr.mxu0 0.0
    %858 = vmatpush1.msra.mxu0 0.0
    %859 = vmatprep.subr.mxu0 0.0
    %860 = vmatpush1.msra.mxu0 0.0
    %861 = vmatprep.subr.mxu0 0.0
    %862 = vmatpush1.msra.mxu0 0.0
    %863 = vmatprep.subr.mxu0 0.0
    %864 = vmatpush1.msra.mxu0 0.0
    %865 = vmatprep.mubr.f32.mxu0 0.0
    %866 = vmatmul.mubr.f32.gmra.mrb[0].mxu0 %v799
    %v867 = vpop.f32.mrb[0].mxu0
    %v868 = vadd.f32 0.0, %v867
    %v869 = vpop.f32.mrb[0].mxu0
    %870 = vdwg.mxu0
    %v871 = vadd.f32 %v239, %v868
    %v872 = vxor.u32 %v871, 2147483648
    %v873 = vmul.f32 %v872, 1.442695
    %v874 = vpow.pop %v873
    %v875 = vadd.f32 %v874, 1.0
    %v876 = vrcp.pop %v875
    %v877 = vmul.f32 1.0, %v876
    %v878 = vtanh.pop %v871
    %v879 = vmul.f32 %v877, %v689
    %881 = vrot.lane.b32.xlu0 %v878, 64
    %v882 = vpop.permute.xlu0 %881
    %v884 = vmul.f32 %v877, %v882
    %886 = vrot.lane.b32.xlu0 %v884, 32
    %v887 = vpop.permute.xlu0 %886
    %v889 = vadd.f32 %v879, %v887
    %v890 = vtanh.pop %v889
    %892 = vrot.lane.b32.xlu0 %v890, 64
    %v893 = vpop.permute.xlu0 %892
    %v895 = vmul.f32 %v877, %v893
    %897 = vrot.lane.b32.xlu0 %v795, 32
    %v898 = vpop.permute.xlu0 %897
    %v899 = vsel %vm135, %v898, 0
    %901 = vmatprep.subr.mxu0 0.0
    %902 = vmatpush1.msra.mxu0 %v382
    %903 = vmatprep.subr.mxu0 0.0
    %904 = vmatpush1.msra.mxu0 %v383
    %905 = vmatprep.subr.mxu0 0.0
    %906 = vmatpush1.msra.mxu0 %v384
    %907 = vmatprep.subr.mxu0 0.0
    %908 = vmatpush1.msra.mxu0 %v385
    %909 = vmatprep.subr.mxu0 0.0
    %910 = vmatpush1.msra.mxu0 0.0
    %911 = vmatprep.subr.mxu0 0.0
    %912 = vmatpush1.msra.mxu0 0.0
    %913 = vmatprep.subr.mxu0 0.0
    %914 = vmatpush1.msra.mxu0 0.0
    %915 = vmatprep.subr.mxu0 0.0
    %916 = vmatpush1.msra.mxu0 0.0
    %917 = vmatprep.subr.mxu0 0.0
    %918 = vmatpush1.msra.mxu0 0.0
    %919 = vmatprep.subr.mxu0 0.0
    %920 = vmatpush1.msra.mxu0 0.0
    %921 = vmatprep.subr.mxu0 0.0
    %922 = vmatpush1.msra.mxu0 0.0
    %923 = vmatprep.subr.mxu0 0.0
    %924 = vmatpush1.msra.mxu0 0.0
    %925 = vmatprep.subr.mxu0 0.0
    %926 = vmatpush1.msra.mxu0 0.0
    %927 = vmatprep.subr.mxu0 0.0
    %928 = vmatpush1.msra.mxu0 0.0
    %929 = vmatprep.subr.mxu0 0.0
    %930 = vmatpush1.msra.mxu0 0.0
    %931 = vmatprep.subr.mxu0 0.0
    %932 = vmatpush1.msra.mxu0 0.0
    %933 = vmatprep.subr.mxu0 0.0
    %934 = vmatpush1.msra.mxu0 0.0
    %935 = vmatprep.subr.mxu0 0.0
    %936 = vmatpush1.msra.mxu0 0.0
    %937 = vmatprep.subr.mxu0 0.0
    %938 = vmatpush1.msra.mxu0 0.0
    %939 = vmatprep.subr.mxu0 0.0
    %940 = vmatpush1.msra.mxu0 0.0
    %941 = vmatprep.subr.mxu0 0.0
    %942 = vmatpush1.msra.mxu0 0.0
    %943 = vmatprep.subr.mxu0 0.0
    %944 = vmatpush1.msra.mxu0 0.0
    %945 = vmatprep.subr.mxu0 0.0
    %946 = vmatpush1.msra.mxu0 0.0
    %947 = vmatprep.subr.mxu0 0.0
    %948 = vmatpush1.msra.mxu0 0.0
    %949 = vmatprep.subr.mxu0 0.0
    %950 = vmatpush1.msra.mxu0 0.0
    %951 = vmatprep.subr.mxu0 0.0
    %952 = vmatpush1.msra.mxu0 0.0
    %953 = vmatprep.subr.mxu0 0.0
    %954 = vmatpush1.msra.mxu0 0.0
    %955 = vmatprep.subr.mxu0 0.0
    %956 = vmatpush1.msra.mxu0 0.0
    %957 = vmatprep.subr.mxu0 0.0
    %958 = vmatpush1.msra.mxu0 0.0
    %959 = vmatprep.subr.mxu0 0.0
    %960 = vmatpush1.msra.mxu0 0.0
    %961 = vmatprep.subr.mxu0 0.0
    %962 = vmatpush1.msra.mxu0 0.0
    %963 = vmatprep.subr.mxu0 0.0
    %964 = vmatpush1.msra.mxu0 0.0
    %965 = vmatprep.mubr.f32.mxu0 0.0
    %966 = vmatmul.mubr.f32.gmra.mrb[0].mxu0 %v899
    %v967 = vpop.f32.mrb[0].mxu0
    %v968 = vadd.f32 0.0, %v967
    %v969 = vpop.f32.mrb[0].mxu0
    %970 = vdwg.mxu0
    %v971 = vadd.f32 %v259, %v968
    %v972 = vxor.u32 %v971, 2147483648
    %v973 = vmul.f32 %v972, 1.442695
    %v974 = vpow.pop %v973
    %v975 = vadd.f32 %v974, 1.0
    %v976 = vrcp.pop %v975
    %v977 = vmul.f32 1.0, %v976
    %v978 = vtanh.pop %v971
    %v979 = vmul.f32 %v977, %v789
    %981 = vrot.lane.b32.xlu0 %v978, 64
    %v982 = vpop.permute.xlu0 %981
    %v984 = vmul.f32 %v977, %v982
    %986 = vrot.lane.b32.xlu0 %v984, 32
    %v987 = vpop.permute.xlu0 %986
    %v989 = vadd.f32 %v979, %v987
    %v990 = vtanh.pop %v989
    %992 = vrot.lane.b32.xlu0 %v990, 64
    %v993 = vpop.permute.xlu0 %992
    %v995 = vmul.f32 %v977, %v993
    %997 = vrot.lane.b32.xlu0 %v895, 32
    %v998 = vpop.permute.xlu0 %997
    %v999 = vsel %vm135, %v998, 0
    %1001 = vmatprep.subr.mxu0 0.0
    %1002 = vmatpush1.msra.mxu0 %v378
    %1003 = vmatprep.subr.mxu0 0.0
    %1004 = vmatpush1.msra.mxu0 %v379
    %1005 = vmatprep.subr.mxu0 0.0
    %1006 = vmatpush1.msra.mxu0 %v380
    %1007 = vmatprep.subr.mxu0 0.0
    %1008 = vmatpush1.msra.mxu0 %v381
    %1009 = vmatprep.subr.mxu0 0.0
    %1010 = vmatpush1.msra.mxu0 0.0
    %1011 = vmatprep.subr.mxu0 0.0
    %1012 = vmatpush1.msra.mxu0 0.0
    %1013 = vmatprep.subr.mxu0 0.0
    %1014 = vmatpush1.msra.mxu0 0.0
    %1015 = vmatprep.subr.mxu0 0.0
    %1016 = vmatpush1.msra.mxu0 0.0
    %1017 = vmatprep.subr.mxu0 0.0
    %1018 = vmatpush1.msra.mxu0 0.0
    %1019 = vmatprep.subr.mxu0 0.0
    %1020 = vmatpush1.msra.mxu0 0.0
    %1021 = vmatprep.subr.mxu0 0.0
    %1022 = vmatpush1.msra.mxu0 0.0
    %1023 = vmatprep.subr.mxu0 0.0
    %1024 = vmatpush1.msra.mxu0 0.0
    %1025 = vmatprep.subr.mxu0 0.0
    %1026 = vmatpush1.msra.mxu0 0.0
    %1027 = vmatprep.subr.mxu0 0.0
    %1028 = vmatpush1.msra.mxu0 0.0
    %1029 = vmatprep.subr.mxu0 0.0
    %1030 = vmatpush1.msra.mxu0 0.0
    %1031 = vmatprep.subr.mxu0 0.0
    %1032 = vmatpush1.msra.mxu0 0.0
    %1033 = vmatprep.subr.mxu0 0.0
    %1034 = vmatpush1.msra.mxu0 0.0
    %1035 = vmatprep.subr.mxu0 0.0
    %1036 = vmatpush1.msra.mxu0 0.0
    %1037 = vmatprep.subr.mxu0 0.0
    %1038 = vmatpush1.msra.mxu0 0.0
    %1039 = vmatprep.subr.mxu0 0.0
    %1040 = vmatpush1.msra.mxu0 0.0
    %1041 = vmatprep.subr.mxu0 0.0
    %1042 = vmatpush1.msra.mxu0 0.0
    %1043 = vmatprep.subr.mxu0 0.0
    %1044 = vmatpush1.msra.mxu0 0.0
    %1045 = vmatprep.subr.mxu0 0.0
    %1046 = vmatpush1.msra.mxu0 0.0
    %1047 = vmatprep.subr.mxu0 0.0
    %1048 = vmatpush1.msra.mxu0 0.0
    %1049 = vmatprep.subr.mxu0 0.0
    %1050 = vmatpush1.msra.mxu0 0.0
    %1051 = vmatprep.subr.mxu0 0.0
    %1052 = vmatpush1.msra.mxu0 0.0
    %1053 = vmatprep.subr.mxu0 0.0
    %1054 = vmatpush1.msra.mxu0 0.0
    %1055 = vmatprep.subr.mxu0 0.0
    %1056 = vmatpush1.msra.mxu0 0.0
    %1057 = vmatprep.subr.mxu0 0.0
    %1058 = vmatpush1.msra.mxu0 0.0
    %1059 = vmatprep.subr.mxu0 0.0
    %1060 = vmatpush1.msra.mxu0 0.0
    %1061 = vmatprep.subr.mxu0 0.0
    %1062 = vmatpush1.msra.mxu0 0.0
    %1063 = vmatprep.subr.mxu0 0.0
    %1064 = vmatpush1.msra.mxu0 0.0
    %1065 = vmatprep.mubr.f32.mxu0 0.0
    %1066 = vmatmul.mubr.f32.gmra.mrb[0].mxu0 %v999
    %v1067 = vpop.f32.mrb[0].mxu0
    %v1068 = vadd.f32 0.0, %v1067
    %v1069 = vpop.f32.mrb[0].mxu0
    %1070 = vdwg.mxu0
    %v1071 = vadd.f32 %v245, %v1068
    %v1072 = vxor.u32 %v1071, 2147483648
    %v1073 = vmul.f32 %v1072, 1.442695
    %v1074 = vpow.pop %v1073
    %v1075 = vadd.f32 %v1074, 1.0
    %v1076 = vrcp.pop %v1075
    %v1077 = vmul.f32 1.0, %v1076
    %v1078 = vtanh.pop %v1071
    %v1079 = vmul.f32 %v1077, %v889
    %1081 = vrot.lane.b32.xlu0 %v1078, 64
    %v1082 = vpop.permute.xlu0 %1081
    %v1084 = vmul.f32 %v1077, %v1082
    %1086 = vrot.lane.b32.xlu0 %v1084, 32
    %v1087 = vpop.permute.xlu0 %1086
    %v1089 = vadd.f32 %v1079, %v1087
    %v1090 = vtanh.pop %v1089
    %1092 = vrot.lane.b32.xlu0 %v1090, 64
    %v1093 = vpop.permute.xlu0 %1092
    %v1095 = vmul.f32 %v1077, %v1093
    %1097 = vrot.lane.b32.xlu0 %v995, 32
    %v1098 = vpop.permute.xlu0 %1097
    %v1099 = vsel %vm135, %v1098, 0
    %1101 = vmatprep.subr.mxu0 0.0
    %1102 = vmatpush1.msra.mxu0 %v382
    %1103 = vmatprep.subr.mxu0 0.0
    %1104 = vmatpush1.msra.mxu0 %v383
    %1105 = vmatprep.subr.mxu0 0.0
    %1106 = vmatpush1.msra.mxu0 %v384
    %1107 = vmatprep.subr.mxu0 0.0
    %1108 = vmatpush1.msra.mxu0 %v385
    %1109 = vmatprep.subr.mxu0 0.0
    %1110 = vmatpush1.msra.mxu0 0.0
    %1111 = vmatprep.subr.mxu0 0.0
    %1112 = vmatpush1.msra.mxu0 0.0
    %1113 = vmatprep.subr.mxu0 0.0
    %1114 = vmatpush1.msra.mxu0 0.0
    %1115 = vmatprep.subr.mxu0 0.0
    %1116 = vmatpush1.msra.mxu0 0.0
    %1117 = vmatprep.subr.mxu0 0.0
    %1118 = vmatpush1.msra.mxu0 0.0
    %1119 = vmatprep.subr.mxu0 0.0
    %1120 = vmatpush1.msra.mxu0 0.0
    %1121 = vmatprep.subr.mxu0 0.0
    %1122 = vmatpush1.msra.mxu0 0.0
    %1123 = vmatprep.subr.mxu0 0.0
    %1124 = vmatpush1.msra.mxu0 0.0
    %1125 = vmatprep.subr.mxu0 0.0
    %1126 = vmatpush1.msra.mxu0 0.0
    %1127 = vmatprep.subr.mxu0 0.0
    %1128 = vmatpush1.msra.mxu0 0.0
    %1129 = vmatprep.subr.mxu0 0.0
    %1130 = vmatpush1.msra.mxu0 0.0
    %1131 = vmatprep.subr.mxu0 0.0
    %1132 = vmatpush1.msra.mxu0 0.0
    %1133 = vmatprep.subr.mxu0 0.0
    %1134 = vmatpush1.msra.mxu0 0.0
    %1135 = vmatprep.subr.mxu0 0.0
    %1136 = vmatpush1.msra.mxu0 0.0
    %1137 = vmatprep.subr.mxu0 0.0
    %1138 = vmatpush1.msra.mxu0 0.0
    %1139 = vmatprep.subr.mxu0 0.0
    %1140 = vmatpush1.msra.mxu0 0.0
    %1141 = vmatprep.subr.mxu0 0.0
    %1142 = vmatpush1.msra.mxu0 0.0
    %1143 = vmatprep.subr.mxu0 0.0
    %1144 = vmatpush1.msra.mxu0 0.0
    %1145 = vmatprep.subr.mxu0 0.0
    %1146 = vmatpush1.msra.mxu0 0.0
    %1147 = vmatprep.subr.mxu0 0.0
    %1148 = vmatpush1.msra.mxu0 0.0
    %1149 = vmatprep.subr.mxu0 0.0
    %1150 = vmatpush1.msra.mxu0 0.0
    %1151 = vmatprep.subr.mxu0 0.0
    %1152 = vmatpush1.msra.mxu0 0.0
    %1153 = vmatprep.subr.mxu0 0.0
    %1154 = vmatpush1.msra.mxu0 0.0
    %1155 = vmatprep.subr.mxu0 0.0
    %1156 = vmatpush1.msra.mxu0 0.0
    %1157 = vmatprep.subr.mxu0 0.0
    %1158 = vmatpush1.msra.mxu0 0.0
    %1159 = vmatprep.subr.mxu0 0.0
    %1160 = vmatpush1.msra.mxu0 0.0
    %1161 = vmatprep.subr.mxu0 0.0
    %1162 = vmatpush1.msra.mxu0 0.0
    %1163 = vmatprep.subr.mxu0 0.0
    %1164 = vmatpush1.msra.mxu0 0.0
    %1165 = vmatprep.mubr.f32.mxu0 0.0
    %1166 = vmatmul.mubr.f32.gmra.mrb[0].mxu0 %v1099
    %v1167 = vpop.f32.mrb[0].mxu0
    %v1168 = vadd.f32 0.0, %v1167
    %v1169 = vpop.f32.mrb[0].mxu0
    %1170 = vdwg.mxu0
    %v1171 = vadd.f32 %v253, %v1168
    %v1172 = vxor.u32 %v1171, 2147483648
    %v1173 = vmul.f32 %v1172, 1.442695
    %v1174 = vpow.pop %v1173
    %v1175 = vadd.f32 %v1174, 1.0
    %v1176 = vrcp.pop %v1175
    %v1177 = vmul.f32 1.0, %v1176
    %v1178 = vtanh.pop %v1171
    %v1179 = vmul.f32 %v1177, %v989
    %1181 = vrot.lane.b32.xlu0 %v1178, 64
    %v1182 = vpop.permute.xlu0 %1181
    %v1184 = vmul.f32 %v1177, %v1182
    %1186 = vrot.lane.b32.xlu0 %v1184, 32
    %v1187 = vpop.permute.xlu0 %1186
    %v1189 = vadd.f32 %v1179, %v1187
    %v1190 = vtanh.pop %v1189
    %1192 = vrot.lane.b32.xlu0 %v1190, 64
    %v1193 = vpop.permute.xlu0 %1192
    %v1195 = vmul.f32 %v1177, %v1193
    %1197 = vrot.lane.b32.xlu0 %v1095, 32
    %v1198 = vpop.permute.xlu0 %1197
    %v1199 = vsel %vm135, %v1198, 0
    %1201 = vmatprep.subr.mxu0 0.0
    %1202 = vmatpush1.msra.mxu0 %v378
    %1203 = vmatprep.subr.mxu0 0.0
    %1204 = vmatpush1.msra.mxu0 %v379
    %1205 = vmatprep.subr.mxu0 0.0
    %1206 = vmatpush1.msra.mxu0 %v380
    %1207 = vmatprep.subr.mxu0 0.0
    %1208 = vmatpush1.msra.mxu0 %v381
    %1209 = vmatprep.subr.mxu0 0.0
    %1210 = vmatpush1.msra.mxu0 0.0
    %1211 = vmatprep.subr.mxu0 0.0
    %1212 = vmatpush1.msra.mxu0 0.0
    %1213 = vmatprep.subr.mxu0 0.0
    %1214 = vmatpush1.msra.mxu0 0.0
    %1215 = vmatprep.subr.mxu0 0.0
    %1216 = vmatpush1.msra.mxu0 0.0
    %1217 = vmatprep.subr.mxu0 0.0
    %1218 = vmatpush1.msra.mxu0 0.0
    %1219 = vmatprep.subr.mxu0 0.0
    %1220 = vmatpush1.msra.mxu0 0.0
    %1221 = vmatprep.subr.mxu0 0.0
    %1222 = vmatpush1.msra.mxu0 0.0
    %1223 = vmatprep.subr.mxu0 0.0
    %1224 = vmatpush1.msra.mxu0 0.0
    %1225 = vmatprep.subr.mxu0 0.0
    %1226 = vmatpush1.msra.mxu0 0.0
    %1227 = vmatprep.subr.mxu0 0.0
    %1228 = vmatpush1.msra.mxu0 0.0
    %1229 = vmatprep.subr.mxu0 0.0
    %1230 = vmatpush1.msra.mxu0 0.0
    %1231 = vmatprep.subr.mxu0 0.0
    %1232 = vmatpush1.msra.mxu0 0.0
    %1233 = vmatprep.subr.mxu0 0.0
    %1234 = vmatpush1.msra.mxu0 0.0
    %1235 = vmatprep.subr.mxu0 0.0
    %1236 = vmatpush1.msra.mxu0 0.0
    %1237 = vmatprep.subr.mxu0 0.0
    %1238 = vmatpush1.msra.mxu0 0.0
    %1239 = vmatprep.subr.mxu0 0.0
    %1240 = vmatpush1.msra.mxu0 0.0
    %1241 = vmatprep.subr.mxu0 0.0
    %1242 = vmatpush1.msra.mxu0 0.0
    %1243 = vmatprep.subr.mxu0 0.0
    %1244 = vmatpush1.msra.mxu0 0.0
    %1245 = vmatprep.subr.mxu0 0.0
    %1246 = vmatpush1.msra.mxu0 0.0
    %1247 = vmatprep.subr.mxu0 0.0
    %1248 = vmatpush1.msra.mxu0 0.0
    %1249 = vmatprep.subr.mxu0 0.0
    %1250 = vmatpush1.msra.mxu0 0.0
    %1251 = vmatprep.subr.mxu0 0.0
    %1252 = vmatpush1.msra.mxu0 0.0
    %1253 = vmatprep.subr.mxu0 0.0
    %1254 = vmatpush1.msra.mxu0 0.0
    %1255 = vmatprep.subr.mxu0 0.0
    %1256 = vmatpush1.msra.mxu0 0.0
    %1257 = vmatprep.subr.mxu0 0.0
    %1258 = vmatpush1.msra.mxu0 0.0
    %1259 = vmatprep.subr.mxu0 0.0
    %1260 = vmatpush1.msra.mxu0 0.0
    %1261 = vmatprep.subr.mxu0 0.0
    %1262 = vmatpush1.msra.mxu0 0.0
    %1263 = vmatprep.subr.mxu0 0.0
    %1264 = vmatpush1.msra.mxu0 0.0
    %1265 = vmatprep.mubr.f32.mxu0 0.0
    %1266 = vmatmul.mubr.f32.gmra.mrb[0].mxu0 %v1199
    %v1267 = vpop.f32.mrb[0].mxu0
    %v1268 = vadd.f32 0.0, %v1267
    %v1269 = vpop.f32.mrb[0].mxu0
    %1270 = vdwg.mxu0
    %v1271 = vadd.f32 %v251, %v1268
    %v1272 = vxor.u32 %v1271, 2147483648
    %v1273 = vmul.f32 %v1272, 1.442695
    %v1274 = vpow.pop %v1273
    %v1275 = vadd.f32 %v1274, 1.0
    %v1276 = vrcp.pop %v1275
    %v1277 = vmul.f32 1.0, %v1276
    %v1278 = vtanh.pop %v1271
    %v1279 = vmul.f32 %v1277, %v1089
    %1281 = vrot.lane.b32.xlu0 %v1278, 64
    %v1282 = vpop.permute.xlu0 %1281
    %v1284 = vmul.f32 %v1277, %v1282
    %1286 = vrot.lane.b32.xlu0 %v1284, 32
    %v1287 = vpop.permute.xlu0 %1286
    %v1289 = vadd.f32 %v1279, %v1287
    %v1290 = vtanh.pop %v1289
    %1292 = vrot.lane.b32.xlu0 %v1290, 64
    %v1293 = vpop.permute.xlu0 %1292
    %v1295 = vmul.f32 %v1277, %v1293
    %1297 = vrot.lane.b32.xlu0 %v1195, 32
    %v1298 = vpop.permute.xlu0 %1297
    %v1299 = vsel %vm135, %v1298, 0
    %1301 = vmatprep.subr.mxu0 0.0
    %1302 = vmatpush1.msra.mxu0 %v382
    %1303 = vmatprep.subr.mxu0 0.0
    %1304 = vmatpush1.msra.mxu0 %v383
    %1305 = vmatprep.subr.mxu0 0.0
    %1306 = vmatpush1.msra.mxu0 %v384
    %1307 = vmatprep.subr.mxu0 0.0
    %1308 = vmatpush1.msra.mxu0 %v385
    %1309 = vmatprep.subr.mxu0 0.0
    %1310 = vmatpush1.msra.mxu0 0.0
    %1311 = vmatprep.subr.mxu0 0.0
    %1312 = vmatpush1.msra.mxu0 0.0
    %1313 = vmatprep.subr.mxu0 0.0
    %1314 = vmatpush1.msra.mxu0 0.0
    %1315 = vmatprep.subr.mxu0 0.0
    %1316 = vmatpush1.msra.mxu0 0.0
    %1317 = vmatprep.subr.mxu0 0.0
    %1318 = vmatpush1.msra.mxu0 0.0
    %1319 = vmatprep.subr.mxu0 0.0
    %1320 = vmatpush1.msra.mxu0 0.0
    %1321 = vmatprep.subr.mxu0 0.0
    %1322 = vmatpush1.msra.mxu0 0.0
    %1323 = vmatprep.subr.mxu0 0.0
    %1324 = vmatpush1.msra.mxu0 0.0
    %1325 = vmatprep.subr.mxu0 0.0
    %1326 = vmatpush1.msra.mxu0 0.0
    %1327 = vmatprep.subr.mxu0 0.0
    %1328 = vmatpush1.msra.mxu0 0.0
    %1329 = vmatprep.subr.mxu0 0.0
    %1330 = vmatpush1.msra.mxu0 0.0
    %1331 = vmatprep.subr.mxu0 0.0
    %1332 = vmatpush1.msra.mxu0 0.0
    %1333 = vmatprep.subr.mxu0 0.0
    %1334 = vmatpush1.msra.mxu0 0.0
    %1335 = vmatprep.subr.mxu0 0.0
    %1336 = vmatpush1.msra.mxu0 0.0
    %1337 = vmatprep.subr.mxu0 0.0
    %1338 = vmatpush1.msra.mxu0 0.0
    %1339 = vmatprep.subr.mxu0 0.0
    %1340 = vmatpush1.msra.mxu0 0.0
    %1341 = vmatprep.subr.mxu0 0.0
    %1342 = vmatpush1.msra.mxu0 0.0
    %1343 = vmatprep.subr.mxu0 0.0
    %1344 = vmatpush1.msra.mxu0 0.0
    %1345 = vmatprep.subr.mxu0 0.0
    %1346 = vmatpush1.msra.mxu0 0.0
    %1347 = vmatprep.subr.mxu0 0.0
    %1348 = vmatpush1.msra.mxu0 0.0
    %1349 = vmatprep.subr.mxu0 0.0
    %1350 = vmatpush1.msra.mxu0 0.0
    %1351 = vmatprep.subr.mxu0 0.0
    %1352 = vmatpush1.msra.mxu0 0.0
    %1353 = vmatprep.subr.mxu0 0.0
    %1354 = vmatpush1.msra.mxu0 0.0
    %1355 = vmatprep.subr.mxu0 0.0
    %1356 = vmatpush1.msra.mxu0 0.0
    %1357 = vmatprep.subr.mxu0 0.0
    %1358 = vmatpush1.msra.mxu0 0.0
    %1359 = vmatprep.subr.mxu0 0.0
    %1360 = vmatpush1.msra.mxu0 0.0
    %1361 = vmatprep.subr.mxu0 0.0
    %1362 = vmatpush1.msra.mxu0 0.0
    %1363 = vmatprep.subr.mxu0 0.0
    %1364 = vmatpush1.msra.mxu0 0.0
    %1365 = vmatprep.mubr.f32.mxu0 0.0
    %1366 = vmatmul.mubr.f32.gmra.mrb[0].mxu0 %v1299
    %v1367 = vpop.f32.mrb[0].mxu0
    %v1368 = vadd.f32 0.0, %v1367
    %v1369 = vpop.f32.mrb[0].mxu0
    %1370 = vdwg.mxu0
    %v1371 = vadd.f32 %v247, %v1368
    %v1372 = vxor.u32 %v1371, 2147483648
    %v1373 = vmul.f32 %v1372, 1.442695
    %v1374 = vpow.pop %v1373
    %v1375 = vadd.f32 %v1374, 1.0
    %v1376 = vrcp.pop %v1375
    %v1377 = vmul.f32 1.0, %v1376
    %v1378 = vtanh.pop %v1371
    %v1379 = vmul.f32 %v1377, %v1189
    %1381 = vrot.lane.b32.xlu0 %v1378, 64
    %v1382 = vpop.permute.xlu0 %1381
    %v1384 = vmul.f32 %v1377, %v1382
    %1386 = vrot.lane.b32.xlu0 %v1384, 32
    %v1387 = vpop.permute.xlu0 %1386
    %v1389 = vadd.f32 %v1379, %v1387
    %v1390 = vtanh.pop %v1389
    %1392 = vrot.lane.b32.xlu0 %v1390, 64
    %v1393 = vpop.permute.xlu0 %1392
    %v1395 = vmul.f32 %v1377, %v1393
    %1397 = vrot.lane.b32.xlu0 %v1295, 32
    %v1398 = vpop.permute.xlu0 %1397
    %v1399 = vsel %vm135, %v1398, 0
    %1401 = vmatprep.subr.mxu0 0.0
    %1402 = vmatpush1.msra.mxu0 %v378
    %1403 = vmatprep.subr.mxu0 0.0
    %1404 = vmatpush1.msra.mxu0 %v379
    %1405 = vmatprep.subr.mxu0 0.0
    %1406 = vmatpush1.msra.mxu0 %v380
    %1407 = vmatprep.subr.mxu0 0.0
    %1408 = vmatpush1.msra.mxu0 %v381
    %1409 = vmatprep.subr.mxu0 0.0
    %1410 = vmatpush1.msra.mxu0 0.0
    %1411 = vmatprep.subr.mxu0 0.0
    %1412 = vmatpush1.msra.mxu0 0.0
    %1413 = vmatprep.subr.mxu0 0.0
    %1414 = vmatpush1.msra.mxu0 0.0
    %1415 = vmatprep.subr.mxu0 0.0
    %1416 = vmatpush1.msra.mxu0 0.0
    %1417 = vmatprep.subr.mxu0 0.0
    %1418 = vmatpush1.msra.mxu0 0.0
    %1419 = vmatprep.subr.mxu0 0.0
    %1420 = vmatpush1.msra.mxu0 0.0
    %1421 = vmatprep.subr.mxu0 0.0
    %1422 = vmatpush1.msra.mxu0 0.0
    %1423 = vmatprep.subr.mxu0 0.0
    %1424 = vmatpush1.msra.mxu0 0.0
    %1425 = vmatprep.subr.mxu0 0.0
    %1426 = vmatpush1.msra.mxu0 0.0
    %1427 = vmatprep.subr.mxu0 0.0
    %1428 = vmatpush1.msra.mxu0 0.0
    %1429 = vmatprep.subr.mxu0 0.0
    %1430 = vmatpush1.msra.mxu0 0.0
    %1431 = vmatprep.subr.mxu0 0.0
    %1432 = vmatpush1.msra.mxu0 0.0
    %1433 = vmatprep.subr.mxu0 0.0
    %1434 = vmatpush1.msra.mxu0 0.0
    %1435 = vmatprep.subr.mxu0 0.0
    %1436 = vmatpush1.msra.mxu0 0.0
    %1437 = vmatprep.subr.mxu0 0.0
    %1438 = vmatpush1.msra.mxu0 0.0
    %1439 = vmatprep.subr.mxu0 0.0
    %1440 = vmatpush1.msra.mxu0 0.0
    %1441 = vmatprep.subr.mxu0 0.0
    %1442 = vmatpush1.msra.mxu0 0.0
    %1443 = vmatprep.subr.mxu0 0.0
    %1444 = vmatpush1.msra.mxu0 0.0
    %1445 = vmatprep.subr.mxu0 0.0
    %1446 = vmatpush1.msra.mxu0 0.0
    %1447 = vmatprep.subr.mxu0 0.0
    %1448 = vmatpush1.msra.mxu0 0.0
    %1449 = vmatprep.subr.mxu0 0.0
    %1450 = vmatpush1.msra.mxu0 0.0
    %1451 = vmatprep.subr.mxu0 0.0
    %1452 = vmatpush1.msra.mxu0 0.0
    %1453 = vmatprep.subr.mxu0 0.0
    %1454 = vmatpush1.msra.mxu0 0.0
    %1455 = vmatprep.subr.mxu0 0.0
    %1456 = vmatpush1.msra.mxu0 0.0
    %1457 = vmatprep.subr.mxu0 0.0
    %1458 = vmatpush1.msra.mxu0 0.0
    %1459 = vmatprep.subr.mxu0 0.0
    %1460 = vmatpush1.msra.mxu0 0.0
    %1461 = vmatprep.subr.mxu0 0.0
    %1462 = vmatpush1.msra.mxu0 0.0
    %1463 = vmatprep.subr.mxu0 0.0
    %1464 = vmatpush1.msra.mxu0 0.0
    %1465 = vmatprep.mubr.f32.mxu0 0.0
    %1466 = vmatmul.mubr.f32.gmra.mrb[0].mxu0 %v1399
    %v1467 = vpop.f32.mrb[0].mxu0
    %v1468 = vadd.f32 0.0, %v1467
    %v1469 = vpop.f32.mrb[0].mxu0
    %1470 = vdwg.mxu0
    %v1471 = vadd.f32 %v257, %v1468
    %v1472 = vxor.u32 %v1471, 2147483648
    %v1473 = vmul.f32 %v1472, 1.442695
    %v1474 = vpow.pop %v1473
    %v1475 = vadd.f32 %v1474, 1.0
    %v1476 = vrcp.pop %v1475
    %v1477 = vmul.f32 1.0, %v1476
    %v1478 = vtanh.pop %v1471
    %v1479 = vmul.f32 %v1477, %v1289
    %1481 = vrot.lane.b32.xlu0 %v1478, 64
    %v1482 = vpop.permute.xlu0 %1481
    %v1484 = vmul.f32 %v1477, %v1482
    %1486 = vrot.lane.b32.xlu0 %v1484, 32
    %v1487 = vpop.permute.xlu0 %1486
    %v1489 = vadd.f32 %v1479, %v1487
    %v1490 = vtanh.pop %v1489
    %1492 = vrot.lane.b32.xlu0 %v1490, 64
    %v1493 = vpop.permute.xlu0 %1492
    %v1495 = vmul.f32 %v1477, %v1493
    %1497 = vrot.lane.b32.xlu0 %v1395, 32
    %v1498 = vpop.permute.xlu0 %1497
    %v1499 = vsel %vm135, %v1498, 0
    %1501 = vmatprep.subr.mxu0 0.0
    %1502 = vmatpush1.msra.mxu0 %v382
    %1503 = vmatprep.subr.mxu0 0.0
    %1504 = vmatpush1.msra.mxu0 %v383
    %1505 = vmatprep.subr.mxu0 0.0
    %1506 = vmatpush1.msra.mxu0 %v384
    %1507 = vmatprep.subr.mxu0 0.0
    %1508 = vmatpush1.msra.mxu0 %v385
    %1509 = vmatprep.subr.mxu0 0.0
    %1510 = vmatpush1.msra.mxu0 0.0
    %1511 = vmatprep.subr.mxu0 0.0
    %1512 = vmatpush1.msra.mxu0 0.0
    %1513 = vmatprep.subr.mxu0 0.0
    %1514 = vmatpush1.msra.mxu0 0.0
    %1515 = vmatprep.subr.mxu0 0.0
    %1516 = vmatpush1.msra.mxu0 0.0
    %1517 = vmatprep.subr.mxu0 0.0
    %1518 = vmatpush1.msra.mxu0 0.0
    %1519 = vmatprep.subr.mxu0 0.0
    %1520 = vmatpush1.msra.mxu0 0.0
    %1521 = vmatprep.subr.mxu0 0.0
    %1522 = vmatpush1.msra.mxu0 0.0
    %1523 = vmatprep.subr.mxu0 0.0
    %1524 = vmatpush1.msra.mxu0 0.0
    %1525 = vmatprep.subr.mxu0 0.0
    %1526 = vmatpush1.msra.mxu0 0.0
    %1527 = vmatprep.subr.mxu0 0.0
    %1528 = vmatpush1.msra.mxu0 0.0
    %1529 = vmatprep.subr.mxu0 0.0
    %1530 = vmatpush1.msra.mxu0 0.0
    %1531 = vmatprep.subr.mxu0 0.0
    %1532 = vmatpush1.msra.mxu0 0.0
    %1533 = vmatprep.subr.mxu0 0.0
    %1534 = vmatpush1.msra.mxu0 0.0
    %1535 = vmatprep.subr.mxu0 0.0
    %1536 = vmatpush1.msra.mxu0 0.0
    %1537 = vmatprep.subr.mxu0 0.0
    %1538 = vmatpush1.msra.mxu0 0.0
    %1539 = vmatprep.subr.mxu0 0.0
    %1540 = vmatpush1.msra.mxu0 0.0
    %1541 = vmatprep.subr.mxu0 0.0
    %1542 = vmatpush1.msra.mxu0 0.0
    %1543 = vmatprep.subr.mxu0 0.0
    %1544 = vmatpush1.msra.mxu0 0.0
    %1545 = vmatprep.subr.mxu0 0.0
    %1546 = vmatpush1.msra.mxu0 0.0
    %1547 = vmatprep.subr.mxu0 0.0
    %1548 = vmatpush1.msra.mxu0 0.0
    %1549 = vmatprep.subr.mxu0 0.0
    %1550 = vmatpush1.msra.mxu0 0.0
    %1551 = vmatprep.subr.mxu0 0.0
    %1552 = vmatpush1.msra.mxu0 0.0
    %1553 = vmatprep.subr.mxu0 0.0
    %1554 = vmatpush1.msra.mxu0 0.0
    %1555 = vmatprep.subr.mxu0 0.0
    %1556 = vmatpush1.msra.mxu0 0.0
    %1557 = vmatprep.subr.mxu0 0.0
    %1558 = vmatpush1.msra.mxu0 0.0
    %1559 = vmatprep.subr.mxu0 0.0
    %1560 = vmatpush1.msra.mxu0 0.0
    %1561 = vmatprep.subr.mxu0 0.0
    %1562 = vmatpush1.msra.mxu0 0.0
    %1563 = vmatprep.subr.mxu0 0.0
    %1564 = vmatpush1.msra.mxu0 0.0
    %1565 = vmatprep.mubr.f32.mxu0 0.0
    %1566 = vmatmul.mubr.f32.gmra.mrb[0].mxu0 %v1499
    %v1567 = vpop.f32.mrb[0].mxu0
    %v1568 = vadd.f32 0.0, %v1567
    %v1569 = vpop.f32.mrb[0].mxu0
    %1570 = vdwg.mxu0
    %v1571 = vadd.f32 %v241, %v1568
    %v1572 = vxor.u32 %v1571, 2147483648
    %v1573 = vmul.f32 %v1572, 1.442695
    %v1574 = vpow.pop %v1573
    %v1575 = vadd.f32 %v1574, 1.0
    %v1576 = vrcp.pop %v1575
    %v1577 = vmul.f32 1.0, %v1576
    %v1578 = vtanh.pop %v1571
    %v1579 = vmul.f32 %v1577, %v1389
    %1581 = vrot.lane.b32.xlu0 %v1578, 64
    %v1582 = vpop.permute.xlu0 %1581
    %v1584 = vmul.f32 %v1577, %v1582
    %1586 = vrot.lane.b32.xlu0 %v1584, 32
    %v1587 = vpop.permute.xlu0 %1586
    %v1589 = vadd.f32 %v1579, %v1587
    %v1590 = vtanh.pop %v1589
    %1592 = vrot.lane.b32.xlu0 %v1590, 64
    %v1593 = vpop.permute.xlu0 %1592
    %v1595 = vmul.f32 %v1577, %v1593
    %1597 = vrot.lane.b32.xlu0 %v1495, 32
    %v1598 = vpop.permute.xlu0 %1597
    %v1599 = vsel %vm135, %v1598, 0
    %1601 = vmatprep.subr.mxu0 0.0
    %1602 = vmatpush1.msra.mxu0 %v378
    %1603 = vmatprep.subr.mxu0 0.0
    %1604 = vmatpush1.msra.mxu0 %v379
    %1605 = vmatprep.subr.mxu0 0.0
    %1606 = vmatpush1.msra.mxu0 %v380
    %1607 = vmatprep.subr.mxu0 0.0
    %1608 = vmatpush1.msra.mxu0 %v381
    %1609 = vmatprep.subr.mxu0 0.0
    %1610 = vmatpush1.msra.mxu0 0.0
    %1611 = vmatprep.subr.mxu0 0.0
    %1612 = vmatpush1.msra.mxu0 0.0
    %1613 = vmatprep.subr.mxu0 0.0
    %1614 = vmatpush1.msra.mxu0 0.0
    %1615 = vmatprep.subr.mxu0 0.0
    %1616 = vmatpush1.msra.mxu0 0.0
    %1617 = vmatprep.subr.mxu0 0.0
    %1618 = vmatpush1.msra.mxu0 0.0
    %1619 = vmatprep.subr.mxu0 0.0
    %1620 = vmatpush1.msra.mxu0 0.0
    %1621 = vmatprep.subr.mxu0 0.0
    %1622 = vmatpush1.msra.mxu0 0.0
    %1623 = vmatprep.subr.mxu0 0.0
    %1624 = vmatpush1.msra.mxu0 0.0
    %1625 = vmatprep.subr.mxu0 0.0
    %1626 = vmatpush1.msra.mxu0 0.0
    %1627 = vmatprep.subr.mxu0 0.0
    %1628 = vmatpush1.msra.mxu0 0.0
    %1629 = vmatprep.subr.mxu0 0.0
    %1630 = vmatpush1.msra.mxu0 0.0
    %1631 = vmatprep.subr.mxu0 0.0
    %1632 = vmatpush1.msra.mxu0 0.0
    %1633 = vmatprep.subr.mxu0 0.0
    %1634 = vmatpush1.msra.mxu0 0.0
    %1635 = vmatprep.subr.mxu0 0.0
    %1636 = vmatpush1.msra.mxu0 0.0
    %1637 = vmatprep.subr.mxu0 0.0
    %1638 = vmatpush1.msra.mxu0 0.0
    %1639 = vmatprep.subr.mxu0 0.0
    %1640 = vmatpush1.msra.mxu0 0.0
    %1641 = vmatprep.subr.mxu0 0.0
    %1642 = vmatpush1.msra.mxu0 0.0
    %1643 = vmatprep.subr.mxu0 0.0
    %1644 = vmatpush1.msra.mxu0 0.0
    %1645 = vmatprep.subr.mxu0 0.0
    %1646 = vmatpush1.msra.mxu0 0.0
    %1647 = vmatprep.subr.mxu0 0.0
    %1648 = vmatpush1.msra.mxu0 0.0
    %1649 = vmatprep.subr.mxu0 0.0
    %1650 = vmatpush1.msra.mxu0 0.0
    %1651 = vmatprep.subr.mxu0 0.0
    %1652 = vmatpush1.msra.mxu0 0.0
    %1653 = vmatprep.subr.mxu0 0.0
    %1654 = vmatpush1.msra.mxu0 0.0
    %1655 = vmatprep.subr.mxu0 0.0
    %1656 = vmatpush1.msra.mxu0 0.0
    %1657 = vmatprep.subr.mxu0 0.0
    %1658 = vmatpush1.msra.mxu0 0.0
    %1659 = vmatprep.subr.mxu0 0.0
    %1660 = vmatpush1.msra.mxu0 0.0
    %1661 = vmatprep.subr.mxu0 0.0
    %1662 = vmatpush1.msra.mxu0 0.0
    %1663 = vmatprep.subr.mxu0 0.0
    %1664 = vmatpush1.msra.mxu0 0.0
    %1665 = vmatprep.mubr.f32.mxu0 0.0
    %1666 = vmatmul.mubr.f32.gmra.mrb[0].mxu0 %v1599
    %v1667 = vpop.f32.mrb[0].mxu0
    %v1668 = vadd.f32 0.0, %v1667
    %v1669 = vpop.f32.mrb[0].mxu0
    %1670 = vdwg.mxu0
    %v1671 = vadd.f32 %v263, %v1668
    %v1672 = vxor.u32 %v1671, 2147483648
    %v1673 = vmul.f32 %v1672, 1.442695
    %v1674 = vpow.pop %v1673
    %v1675 = vadd.f32 %v1674, 1.0
    %v1676 = vrcp.pop %v1675
    %v1677 = vmul.f32 1.0, %v1676
    %v1678 = vtanh.pop %v1671
    %v1679 = vmul.f32 %v1677, %v1489
    %1681 = vrot.lane.b32.xlu0 %v1678, 64
    %v1682 = vpop.permute.xlu0 %1681
    %v1684 = vmul.f32 %v1677, %v1682
    %1686 = vrot.lane.b32.xlu0 %v1684, 32
    %v1687 = vpop.permute.xlu0 %1686
    %v1689 = vadd.f32 %v1679, %v1687
    %v1690 = vtanh.pop %v1689
    %1692 = vrot.lane.b32.xlu0 %v1690, 64
    %v1693 = vpop.permute.xlu0 %1692
    %v1695 = vmul.f32 %v1677, %v1693
    %1697 = vrot.lane.b32.xlu0 %v1595, 32
    %v1698 = vpop.permute.xlu0 %1697
    %v1699 = vsel %vm135, %v1698, 0
    %1701 = vmatprep.subr.mxu0 0.0
    %1702 = vmatpush1.msra.mxu0 %v382
    %1703 = vmatprep.subr.mxu0 0.0
    %1704 = vmatpush1.msra.mxu0 %v383
    %1705 = vmatprep.subr.mxu0 0.0
    %1706 = vmatpush1.msra.mxu0 %v384
    %1707 = vmatprep.subr.mxu0 0.0
    %1708 = vmatpush1.msra.mxu0 %v385
    %1709 = vmatprep.subr.mxu0 0.0
    %1710 = vmatpush1.msra.mxu0 0.0
    %1711 = vmatprep.subr.mxu0 0.0
    %1712 = vmatpush1.msra.mxu0 0.0
    %1713 = vmatprep.subr.mxu0 0.0
    %1714 = vmatpush1.msra.mxu0 0.0
    %1715 = vmatprep.subr.mxu0 0.0
    %1716 = vmatpush1.msra.mxu0 0.0
    %1717 = vmatprep.subr.mxu0 0.0
    %1718 = vmatpush1.msra.mxu0 0.0
    %1719 = vmatprep.subr.mxu0 0.0
    %1720 = vmatpush1.msra.mxu0 0.0
    %1721 = vmatprep.subr.mxu0 0.0
    %1722 = vmatpush1.msra.mxu0 0.0
    %1723 = vmatprep.subr.mxu0 0.0
    %1724 = vmatpush1.msra.mxu0 0.0
    %1725 = vmatprep.subr.mxu0 0.0
    %1726 = vmatpush1.msra.mxu0 0.0
    %1727 = vmatprep.subr.mxu0 0.0
    %1728 = vmatpush1.msra.mxu0 0.0
    %1729 = vmatprep.subr.mxu0 0.0
    %1730 = vmatpush1.msra.mxu0 0.0
    %1731 = vmatprep.subr.mxu0 0.0
    %1732 = vmatpush1.msra.mxu0 0.0
    %1733 = vmatprep.subr.mxu0 0.0
    %1734 = vmatpush1.msra.mxu0 0.0
    %1735 = vmatprep.subr.mxu0 0.0
    %1736 = vmatpush1.msra.mxu0 0.0
    %1737 = vmatprep.subr.mxu0 0.0
    %1738 = vmatpush1.msra.mxu0 0.0
    %1739 = vmatprep.subr.mxu0 0.0
    %1740 = vmatpush1.msra.mxu0 0.0
    %1741 = vmatprep.subr.mxu0 0.0
    %1742 = vmatpush1.msra.mxu0 0.0
    %1743 = vmatprep.subr.mxu0 0.0
    %1744 = vmatpush1.msra.mxu0 0.0
    %1745 = vmatprep.subr.mxu0 0.0
    %1746 = vmatpush1.msra.mxu0 0.0
    %1747 = vmatprep.subr.mxu0 0.0
    %1748 = vmatpush1.msra.mxu0 0.0
    %1749 = vmatprep.subr.mxu0 0.0
    %1750 = vmatpush1.msra.mxu0 0.0
    %1751 = vmatprep.subr.mxu0 0.0
    %1752 = vmatpush1.msra.mxu0 0.0
    %1753 = vmatprep.subr.mxu0 0.0
    %1754 = vmatpush1.msra.mxu0 0.0
    %1755 = vmatprep.subr.mxu0 0.0
    %1756 = vmatpush1.msra.mxu0 0.0
    %1757 = vmatprep.subr.mxu0 0.0
    %1758 = vmatpush1.msra.mxu0 0.0
    %1759 = vmatprep.subr.mxu0 0.0
    %1760 = vmatpush1.msra.mxu0 0.0
    %1761 = vmatprep.subr.mxu0 0.0
    %1762 = vmatpush1.msra.mxu0 0.0
    %1763 = vmatprep.subr.mxu0 0.0
    %1764 = vmatpush1.msra.mxu0 0.0
    %1765 = vmatprep.mubr.f32.mxu0 0.0
    %1766 = vmatmul.mubr.f32.gmra.mrb[0].mxu0 %v1699
    %v1767 = vpop.f32.mrb[0].mxu0
    %v1768 = vadd.f32 0.0, %v1767
    %v1769 = vpop.f32.mrb[0].mxu0
    %1770 = vdwg.mxu0
    %v1771 = vadd.f32 %v235, %v1768
    %v1772 = vxor.u32 %v1771, 2147483648
    %v1773 = vmul.f32 %v1772, 1.442695
    %v1774 = vpow.pop %v1773
    %v1775 = vadd.f32 %v1774, 1.0
    %v1776 = vrcp.pop %v1775
    %v1777 = vmul.f32 1.0, %v1776
    %v1778 = vtanh.pop %v1771
    %v1779 = vmul.f32 %v1777, %v1589
    %1781 = vrot.lane.b32.xlu0 %v1778, 64
    %v1782 = vpop.permute.xlu0 %1781
    %v1784 = vmul.f32 %v1777, %v1782
    %1786 = vrot.lane.b32.xlu0 %v1784, 32
    %v1787 = vpop.permute.xlu0 %1786
    %v1789 = vadd.f32 %v1779, %v1787
    %v1790 = vtanh.pop %v1789
    %1792 = vrot.lane.b32.xlu0 %v1790, 64
    %v1793 = vpop.permute.xlu0 %1792
    %v1795 = vmul.f32 %v1777, %v1793
    %1797 = vrot.lane.b32.xlu0 %v1695, 32
    %v1798 = vpop.permute.xlu0 %1797
    %v1799 = vsel %vm135, %v1798, 0
    %1801 = vmatprep.subr.mxu0 0.0
    %1802 = vmatpush1.msra.mxu0 %v378
    %1803 = vmatprep.subr.mxu0 0.0
    %1804 = vmatpush1.msra.mxu0 %v379
    %1805 = vmatprep.subr.mxu0 0.0
    %1806 = vmatpush1.msra.mxu0 %v380
    %1807 = vmatprep.subr.mxu0 0.0
    %1808 = vmatpush1.msra.mxu0 %v381
    %1809 = vmatprep.subr.mxu0 0.0
    %1810 = vmatpush1.msra.mxu0 0.0
    %1811 = vmatprep.subr.mxu0 0.0
    %1812 = vmatpush1.msra.mxu0 0.0
    %1813 = vmatprep.subr.mxu0 0.0
    %1814 = vmatpush1.msra.mxu0 0.0
    %1815 = vmatprep.subr.mxu0 0.0
    %1816 = vmatpush1.msra.mxu0 0.0
    %1817 = vmatprep.subr.mxu0 0.0
    %1818 = vmatpush1.msra.mxu0 0.0
    %1819 = vmatprep.subr.mxu0 0.0
    %1820 = vmatpush1.msra.mxu0 0.0
    %1821 = vmatprep.subr.mxu0 0.0
    %1822 = vmatpush1.msra.mxu0 0.0
    %1823 = vmatprep.subr.mxu0 0.0
    %1824 = vmatpush1.msra.mxu0 0.0
    %1825 = vmatprep.subr.mxu0 0.0
    %1826 = vmatpush1.msra.mxu0 0.0
    %1827 = vmatprep.subr.mxu0 0.0
    %1828 = vmatpush1.msra.mxu0 0.0
    %1829 = vmatprep.subr.mxu0 0.0
    %1830 = vmatpush1.msra.mxu0 0.0
    %1831 = vmatprep.subr.mxu0 0.0
    %1832 = vmatpush1.msra.mxu0 0.0
    %1833 = vmatprep.subr.mxu0 0.0
    %1834 = vmatpush1.msra.mxu0 0.0
    %1835 = vmatprep.subr.mxu0 0.0
    %1836 = vmatpush1.msra.mxu0 0.0
    %1837 = vmatprep.subr.mxu0 0.0
    %1838 = vmatpush1.msra.mxu0 0.0
    %1839 = vmatprep.subr.mxu0 0.0
    %1840 = vmatpush1.msra.mxu0 0.0
    %1841 = vmatprep.subr.mxu0 0.0
    %1842 = vmatpush1.msra.mxu0 0.0
    %1843 = vmatprep.subr.mxu0 0.0
    %1844 = vmatpush1.msra.mxu0 0.0
    %1845 = vmatprep.subr.mxu0 0.0
    %1846 = vmatpush1.msra.mxu0 0.0
    %1847 = vmatprep.subr.mxu0 0.0
    %1848 = vmatpush1.msra.mxu0 0.0
    %1849 = vmatprep.subr.mxu0 0.0
    %1850 = vmatpush1.msra.mxu0 0.0
    %1851 = vmatprep.subr.mxu0 0.0
    %1852 = vmatpush1.msra.mxu0 0.0
    %1853 = vmatprep.subr.mxu0 0.0
    %1854 = vmatpush1.msra.mxu0 0.0
    %1855 = vmatprep.subr.mxu0 0.0
    %1856 = vmatpush1.msra.mxu0 0.0
    %1857 = vmatprep.subr.mxu0 0.0
    %1858 = vmatpush1.msra.mxu0 0.0
    %1859 = vmatprep.subr.mxu0 0.0
    %1860 = vmatpush1.msra.mxu0 0.0
    %1861 = vmatprep.subr.mxu0 0.0
    %1862 = vmatpush1.msra.mxu0 0.0
    %1863 = vmatprep.subr.mxu0 0.0
    %1864 = vmatpush1.msra.mxu0 0.0
    %1865 = vmatprep.mubr.f32.mxu0 0.0
    %1866 = vmatmul.mubr.f32.gmra.mrb[0].mxu0 %v1799
    %v1867 = vpop.f32.mrb[0].mxu0
    %v1868 = vadd.f32 0.0, %v1867
    %v1869 = vpop.f32.mrb[0].mxu0
    %1870 = vdwg.mxu0
    %v1871 = vadd.f32 %v269, %v1868
    %v1872 = vxor.u32 %v1871, 2147483648
    %v1873 = vmul.f32 %v1872, 1.442695
    %v1874 = vpow.pop %v1873
    %v1875 = vadd.f32 %v1874, 1.0
    %v1876 = vrcp.pop %v1875
    %v1877 = vmul.f32 1.0, %v1876
    %v1878 = vtanh.pop %v1871
    %v1879 = vmul.f32 %v1877, %v1689
    %1881 = vrot.lane.b32.xlu0 %v1878, 64
    %v1882 = vpop.permute.xlu0 %1881
    %v1884 = vmul.f32 %v1877, %v1882
    %1886 = vrot.lane.b32.xlu0 %v1884, 32
    %v1887 = vpop.permute.xlu0 %1886
    %v1889 = vadd.f32 %v1879, %v1887
    %v1890 = vtanh.pop %v1889
    %1892 = vrot.lane.b32.xlu0 %v1890, 64
    %v1893 = vpop.permute.xlu0 %1892
    %v1895 = vmul.f32 %v1877, %v1893
    %1897 = vrot.lane.b32.xlu0 %v1795, 32
    %v1898 = vpop.permute.xlu0 %1897
    %v1899 = vsel %vm135, %v1898, 0
    %1901 = vmatprep.subr.mxu0 0.0
    %1902 = vmatpush1.msra.mxu0 %v382
    %1903 = vmatprep.subr.mxu0 0.0
    %1904 = vmatpush1.msra.mxu0 %v383
    %1905 = vmatprep.subr.mxu0 0.0
    %1906 = vmatpush1.msra.mxu0 %v384
    %1907 = vmatprep.subr.mxu0 0.0
    %1908 = vmatpush1.msra.mxu0 %v385
    %1909 = vmatprep.subr.mxu0 0.0
    %1910 = vmatpush1.msra.mxu0 0.0
    %1911 = vmatprep.subr.mxu0 0.0
    %1912 = vmatpush1.msra.mxu0 0.0
    %1913 = vmatprep.subr.mxu0 0.0
    %1914 = vmatpush1.msra.mxu0 0.0
    %1915 = vmatprep.subr.mxu0 0.0
    %1916 = vmatpush1.msra.mxu0 0.0
    %1917 = vmatprep.subr.mxu0 0.0
    %1918 = vmatpush1.msra.mxu0 0.0
    %1919 = vmatprep.subr.mxu0 0.0
    %1920 = vmatpush1.msra.mxu0 0.0
    %1921 = vmatprep.subr.mxu0 0.0
    %1922 = vmatpush1.msra.mxu0 0.0
    %1923 = vmatprep.subr.mxu0 0.0
    %1924 = vmatpush1.msra.mxu0 0.0
    %1925 = vmatprep.subr.mxu0 0.0
    %1926 = vmatpush1.msra.mxu0 0.0
    %1927 = vmatprep.subr.mxu0 0.0
    %1928 = vmatpush1.msra.mxu0 0.0
    %1929 = vmatprep.subr.mxu0 0.0
    %1930 = vmatpush1.msra.mxu0 0.0
    %1931 = vmatprep.subr.mxu0 0.0
    %1932 = vmatpush1.msra.mxu0 0.0
    %1933 = vmatprep.subr.mxu0 0.0
    %1934 = vmatpush1.msra.mxu0 0.0
    %1935 = vmatprep.subr.mxu0 0.0
    %1936 = vmatpush1.msra.mxu0 0.0
    %1937 = vmatprep.subr.mxu0 0.0
    %1938 = vmatpush1.msra.mxu0 0.0
    %1939 = vmatprep.subr.mxu0 0.0
    %1940 = vmatpush1.msra.mxu0 0.0
    %1941 = vmatprep.subr.mxu0 0.0
    %1942 = vmatpush1.msra.mxu0 0.0
    %1943 = vmatprep.subr.mxu0 0.0
    %1944 = vmatpush1.msra.mxu0 0.0
    %1945 = vmatprep.subr.mxu0 0.0
    %1946 = vmatpush1.msra.mxu0 0.0
    %1947 = vmatprep.subr.mxu0 0.0
    %1948 = vmatpush1.msra.mxu0 0.0
    %1949 = vmatprep.subr.mxu0 0.0
    %1950 = vmatpush1.msra.mxu0 0.0
    %1951 = vmatprep.subr.mxu0 0.0
    %1952 = vmatpush1.msra.mxu0 0.0
    %1953 = vmatprep.subr.mxu0 0.0
    %1954 = vmatpush1.msra.mxu0 0.0
    %1955 = vmatprep.subr.mxu0 0.0
    %1956 = vmatpush1.msra.mxu0 0.0
    %1957 = vmatprep.subr.mxu0 0.0
    %1958 = vmatpush1.msra.mxu0 0.0
    %1959 = vmatprep.subr.mxu0 0.0
    %1960 = vmatpush1.msra.mxu0 0.0
    %1961 = vmatprep.subr.mxu0 0.0
    %1962 = vmatpush1.msra.mxu0 0.0
    %1963 = vmatprep.subr.mxu0 0.0
    %1964 = vmatpush1.msra.mxu0 0.0
    %1965 = vmatprep.mubr.f32.mxu0 0.0
    %1966 = vmatmul.mubr.f32.gmra.mrb[0].mxu0 %v1899
    %v1967 = vpop.f32.mrb[0].mxu0
    %v1968 = vadd.f32 0.0, %v1967
    %v1969 = vpop.f32.mrb[0].mxu0
    %1970 = vdwg.mxu0
    %v1971 = vadd.f32 %v229, %v1968
    %v1972 = vxor.u32 %v1971, 2147483648
    %v1973 = vmul.f32 %v1972, 1.442695
    %v1974 = vpow.pop %v1973
    %v1975 = vadd.f32 %v1974, 1.0
    %v1976 = vrcp.pop %v1975
    %v1977 = vmul.f32 1.0, %v1976
    %v1978 = vtanh.pop %v1971
    %v1979 = vmul.f32 %v1977, %v1789
    %1981 = vrot.lane.b32.xlu0 %v1978, 64
    %v1982 = vpop.permute.xlu0 %1981
    %v1984 = vmul.f32 %v1977, %v1982
    %1986 = vrot.lane.b32.xlu0 %v1984, 32
    %v1987 = vpop.permute.xlu0 %1986
    %v1989 = vadd.f32 %v1979, %v1987
    %v1990 = vtanh.pop %v1989
    %1992 = vrot.lane.b32.xlu0 %v1990, 64
    %v1993 = vpop.permute.xlu0 %1992
    %v1995 = vmul.f32 %v1977, %v1993
    %v1996 = vadd.f32 %v493, %v1995
    %v1997 = vadd.f32 %v695, %v1795
    %v1998 = vadd.f32 %v895, %v1595
    %v1999 = vadd.f32 %v1095, %v1395
    %v2000 = vadd.f32 %v1295, %v1195
    %v2001 = vadd.f32 %v1495, %v995
    %v2002 = vadd.f32 %v1695, %v795
    %v2003 = vadd.f32 %v1895, %v595
    %v2004 = vld [vmem:[#allocation10] sm:$0xff]
    %v2005 = vld [vmem:[#allocation10 + $0x8] sm:$0xff]
    %v2006 = vld [vmem:[#allocation10 + $0x10] sm:$0xff]
    %v2007 = vld [vmem:[#allocation10 + $0x18] sm:$0xff]
    %2016 = vrot.lane.b32.xlu0 %v1996, 32
    %v2017 = vpop.permute.xlu0 %2016
    %2018 = vrot.lane.b32.xlu0 %v1997, 32
    %v2019 = vpop.permute.xlu0 %2018
    %2020 = vrot.lane.b32.xlu0 %v1998, 32
    %v2021 = vpop.permute.xlu0 %2020
    %2022 = vrot.lane.b32.xlu0 %v1999, 32
    %v2023 = vpop.permute.xlu0 %2022
    %2024 = vrot.lane.b32.xlu0 %v2000, 32
    %v2025 = vpop.permute.xlu0 %2024
    %2026 = vrot.lane.b32.xlu0 %v2001, 32
    %v2027 = vpop.permute.xlu0 %2026
    %2028 = vrot.lane.b32.xlu0 %v2002, 32
    %v2029 = vpop.permute.xlu0 %2028
    %2030 = vrot.lane.b32.xlu0 %v2003, 32
    %v2031 = vpop.permute.xlu0 %2030
    %v2032 = vsel %vm135, %v2017, 0
    %v2034 = vsel %vm135, %v2019, 0
    %v2036 = vsel %vm135, %v2021, 0
    %v2038 = vsel %vm135, %v2023, 0
    %v2040 = vsel %vm135, %v2025, 0
    %v2042 = vsel %vm135, %v2027, 0
    %v2044 = vsel %vm135, %v2029, 0
    %v2046 = vsel %vm135, %v2031, 0
    %2048 = vmatprep.subr.mxu0 0.0
    %2049 = vmatpush1.msra.mxu0 %v2004
    %2050 = vmatprep.subr.mxu0 0.0
    %2051 = vmatpush1.msra.mxu0 %v2005
    %2052 = vmatprep.subr.mxu0 0.0
    %2053 = vmatpush1.msra.mxu0 %v2006
    %2054 = vmatprep.subr.mxu0 0.0
    %2055 = vmatpush1.msra.mxu0 %v2007
    %2056 = vmatprep.subr.mxu0 0.0
    %2057 = vmatpush1.msra.mxu0 0.0
    %2058 = vmatprep.subr.mxu0 0.0
    %2059 = vmatpush1.msra.mxu0 0.0
    %2060 = vmatprep.subr.mxu0 0.0
    %2061 = vmatpush1.msra.mxu0 0.0
    %2062 = vmatprep.subr.mxu0 0.0
    %2063 = vmatpush1.msra.mxu0 0.0
    %2064 = vmatprep.subr.mxu0 0.0
    %2065 = vmatpush1.msra.mxu0 0.0
    %2066 = vmatprep.subr.mxu0 0.0
    %2067 = vmatpush1.msra.mxu0 0.0
    %2068 = vmatprep.subr.mxu0 0.0
    %2069 = vmatpush1.msra.mxu0 0.0
    %2070 = vmatprep.subr.mxu0 0.0
    %2071 = vmatpush1.msra.mxu0 0.0
    %2072 = vmatprep.subr.mxu0 0.0
    %2073 = vmatpush1.msra.mxu0 0.0
    %2074 = vmatprep.subr.mxu0 0.0
    %2075 = vmatpush1.msra.mxu0 0.0
    %2076 = vmatprep.subr.mxu0 0.0
    %2077 = vmatpush1.msra.mxu0 0.0
    %2078 = vmatprep.subr.mxu0 0.0
    %2079 = vmatpush1.msra.mxu0 0.0
    %2080 = vmatprep.subr.mxu0 0.0
    %2081 = vmatpush1.msra.mxu0 0.0
    %2082 = vmatprep.subr.mxu0 0.0
    %2083 = vmatpush1.msra.mxu0 0.0
    %2084 = vmatprep.subr.mxu0 0.0
    %2085 = vmatpush1.msra.mxu0 0.0
    %2086 = vmatprep.subr.mxu0 0.0
    %2087 = vmatpush1.msra.mxu0 0.0
    %2088 = vmatprep.subr.mxu0 0.0
    %2089 = vmatpush1.msra.mxu0 0.0
    %2090 = vmatprep.subr.mxu0 0.0
    %2091 = vmatpush1.msra.mxu0 0.0
    %2092 = vmatprep.subr.mxu0 0.0
    %2093 = vmatpush1.msra.mxu0 0.0
    %2094 = vmatprep.subr.mxu0 0.0
    %2095 = vmatpush1.msra.mxu0 0.0
    %2096 = vmatprep.subr.mxu0 0.0
    %2097 = vmatpush1.msra.mxu0 0.0
    %2098 = vmatprep.subr.mxu0 0.0
    %2099 = vmatpush1.msra.mxu0 0.0
    %2100 = vmatprep.subr.mxu0 0.0
    %2101 = vmatpush1.msra.mxu0 0.0
    %2102 = vmatprep.subr.mxu0 0.0
    %2103 = vmatpush1.msra.mxu0 0.0
    %2104 = vmatprep.subr.mxu0 0.0
    %2105 = vmatpush1.msra.mxu0 0.0
    %2106 = vmatprep.subr.mxu0 0.0
    %2107 = vmatpush1.msra.mxu0 0.0
    %2108 = vmatprep.subr.mxu0 0.0
    %2109 = vmatpush1.msra.mxu0 0.0
    %2110 = vmatprep.subr.mxu0 0.0
    %2111 = vmatpush1.msra.mxu0 0.0
    %2112 = vmatprep.mubr.f32.mxu0 0.0
    %2113 = vmatmul.mubr.f32.gmra.mrb[0].mxu0 %v2032
    %v2114 = vpop.f32.mrb[0].mxu0
    %v2115 = vadd.f32 0.0, %v2114
    %v2116 = vpop.f32.mrb[0].mxu0
    %2117 = vmatprep.mubr.f32.mxu0 0.0
    %2118 = vmatmul.mubr.f32.gmra.mrb[0].mxu0 %v2034
    %v2119 = vpop.f32.mrb[0].mxu0
    %v2120 = vadd.f32 0.0, %v2119
    %v2121 = vpop.f32.mrb[0].mxu0
    %2122 = vmatprep.mubr.f32.mxu0 0.0
    %2123 = vmatmul.mubr.f32.gmra.mrb[0].mxu0 %v2036
    %v2124 = vpop.f32.mrb[0].mxu0
    %v2125 = vadd.f32 0.0, %v2124
    %v2126 = vpop.f32.mrb[0].mxu0
    %2127 = vmatprep.mubr.f32.mxu0 0.0
    %2128 = vmatmul.mubr.f32.gmra.mrb[0].mxu0 %v2038
    %v2129 = vpop.f32.mrb[0].mxu0
    %v2130 = vadd.f32 0.0, %v2129
    %v2131 = vpop.f32.mrb[0].mxu0
    %2132 = vmatprep.mubr.f32.mxu0 0.0
    %2133 = vmatmul.mubr.f32.gmra.mrb[0].mxu0 %v2040
    %v2134 = vpop.f32.mrb[0].mxu0
    %v2135 = vadd.f32 0.0, %v2134
    %v2136 = vpop.f32.mrb[0].mxu0
    %2137 = vmatprep.mubr.f32.mxu0 0.0
    %2138 = vmatmul.mubr.f32.gmra.mrb[0].mxu0 %v2042
    %v2139 = vpop.f32.mrb[0].mxu0
    %v2140 = vadd.f32 0.0, %v2139
    %v2141 = vpop.f32.mrb[0].mxu0
    %2142 = vmatprep.mubr.f32.mxu0 0.0
    %2143 = vmatmul.mubr.f32.gmra.mrb[0].mxu0 %v2044
    %v2144 = vpop.f32.mrb[0].mxu0
    %v2145 = vadd.f32 0.0, %v2144
    %v2146 = vpop.f32.mrb[0].mxu0
    %2147 = vmatprep.mubr.f32.mxu0 0.0
    %2148 = vmatmul.mubr.f32.gmra.mrb[0].mxu0 %v2046
    %v2149 = vpop.f32.mrb[0].mxu0
    %v2150 = vadd.f32 0.0, %v2149
    %v2151 = vpop.f32.mrb[0].mxu0
    %2152 = vdwg.mxu0
    %v2153 = vadd.f32 %v340, %v2115
    %v2154 = vadd.f32 %v345, %v2120
    %v2155 = vadd.f32 %v350, %v2125
    %v2156 = vadd.f32 %v355, %v2130
    %v2157 = vadd.f32 %v360, %v2135
    %v2158 = vadd.f32 %v365, %v2140
    %v2159 = vadd.f32 %v370, %v2145
    %v2160 = vadd.f32 %v375, %v2150
    %v2161 = vxor.u32 %v2153, 2147483648
    %v2162 = vxor.u32 %v2154, 2147483648
    %v2163 = vxor.u32 %v2155, 2147483648
    %v2164 = vxor.u32 %v2156, 2147483648
    %v2165 = vxor.u32 %v2157, 2147483648
    %v2166 = vxor.u32 %v2158, 2147483648
    %v2167 = vxor.u32 %v2159, 2147483648
    %v2168 = vxor.u32 %v2160, 2147483648
    %v2169 = vmul.f32 %v2161, 1.442695
    %v2170 = vpow.pop %v2169
    %v2171 = vmul.f32 %v2162, 1.442695
    %v2172 = vpow.pop %v2171
    %v2173 = vmul.f32 %v2163, 1.442695
    %v2174 = vpow.pop %v2173
    %v2175 = vmul.f32 %v2164, 1.442695
    %v2176 = vpow.pop %v2175
    %v2177 = vmul.f32 %v2165, 1.442695
    %v2178 = vpow.pop %v2177
    %v2179 = vmul.f32 %v2166, 1.442695
    %v2180 = vpow.pop %v2179
    %v2181 = vmul.f32 %v2167, 1.442695
    %v2182 = vpow.pop %v2181
    %v2183 = vmul.f32 %v2168, 1.442695
    %v2184 = vpow.pop %v2183
    %v2185 = vadd.f32 %v2170, 1.0
    %v2186 = vadd.f32 %v2172, 1.0
    %v2187 = vadd.f32 %v2174, 1.0
    %v2188 = vadd.f32 %v2176, 1.0
    %v2189 = vadd.f32 %v2178, 1.0
    %v2190 = vadd.f32 %v2180, 1.0
    %v2191 = vadd.f32 %v2182, 1.0
    %v2192 = vadd.f32 %v2184, 1.0
    %v2193 = vrcp.pop %v2185
    %v2194 = vmul.f32 1.0, %v2193
    %v2195 = vrcp.pop %v2186
    %v2196 = vmul.f32 1.0, %v2195
    %v2197 = vrcp.pop %v2187
    %v2198 = vmul.f32 1.0, %v2197
    %v2199 = vrcp.pop %v2188
    %v2200 = vmul.f32 1.0, %v2199
    %v2201 = vrcp.pop %v2189
    %v2202 = vmul.f32 1.0, %v2201
    %v2203 = vrcp.pop %v2190
    %v2204 = vmul.f32 1.0, %v2203
    %v2205 = vrcp.pop %v2191
    %v2206 = vmul.f32 1.0, %v2205
    %v2207 = vrcp.pop %v2192
    %v2208 = vmul.f32 1.0, %v2207
    %v2209 = vmul.f32 %v98, %v2194
    %v2210 = vmul.f32 %v99, %v2196
    %v2211 = vmul.f32 %v100, %v2198
    %v2212 = vmul.f32 %v101, %v2200
    %v2213 = vmul.f32 %v102, %v2202
    %v2214 = vmul.f32 %v103, %v2204
    %v2215 = vmul.f32 %v104, %v2206
    %v2216 = vmul.f32 %v105, %v2208
    %v2217 = vadd.f32 %v2209, %v2210
    %v2218 = vadd.f32 %v2211, %v2212
    %v2219 = vadd.f32 %v2213, %v2214
    %v2220 = vadd.f32 %v2215, %v2216
    %v2221 = vadd.f32 %v2217, %v2218
    %v2222 = vadd.f32 %v2219, %v2220
    %v2223 = vadd.f32 %v2221, %v2222
    %v2224 = vmul.f32 %v2223, 0.125
    %2225 = vst.msk [vmem:[#allocation11] sm:$0xff] %vm135, %v2224
    // Predicated region
    $region54: #{tpu_custom_call.1} parent=1 // pred_check
      _
    $region55: #{tpu_custom_call.1} parent=1 // pred_check_branch
      %2227 = sbr.rel (0) target = $region57
    $region56: #{tpu_custom_call.1} parent=1 // pred_region
      %s2229 = ssub.s32 128, 128
      %2230 = vsyncadd [#allocation4], %s2229
      %s2232 = sshll.u32 [#allocation11], 4
      %s2233 = int_to_ptr.vmem [resolvable:$true] %s2232
      %2235 = dma.vmem_to_hbm [thread:$0]  %s2233, 128, %s8, [#allocation4]
    $region57: #{tpu_custom_call.1} parent=1 // pred_fallthru
      _
    // Predicated region
    $region58: #{tpu_custom_call.1} parent=1 // pred_check
      _
    $region59: #{tpu_custom_call.1} parent=1 // pred_check_branch
      %2237 = sbr.rel (0) target = $region61
    $region60: #{tpu_custom_call.1} parent=1 // pred_region
      %2238 = dma.done [#allocation4], 128
    $region61: #{tpu_custom_call.1} parent=1 // pred_fallthru
      _
    %2239 = vsyncpa [#allocation3], 1
    %2240 = vsyncpa [#allocation6], 1
    %2241 = vsyncpa [#allocation9], 1
    %2242 = vsyncpa [#allocation4], 1

</llo_original>
